<compile_context>
chip_gen: v7x
topology: tpu7x:2x2x1
jax: 0.10.0
libtpu: 0.0.40
codegen_flags: <defaults>
</compile_context>

<pallas_src>
import functools

import jax
import jax.numpy as jnp
from jax.experimental import pallas as pl
from jax.experimental.pallas import tpu as pltpu


# ---------------------------------------------------------------------------
# Fused Pallas kernel: extractor + aggregator + 1x1 top for ONE batch element
# (one grid step); all activations stay in VMEM / vregs.
# ---------------------------------------------------------------------------
def _fused_wav2vec_kernel(xq_ref, w1_ref, b1_ref, w2_ref, b2_ref,
                          w3_ref, b3_ref, w4_ref, b4_ref, w5_ref, b5_ref,
                          o_ref, *, t2, n_ph, k3, t_pad):
    f32, bf16 = jnp.float32, jnp.bfloat16
    xq = xq_ref[...].astype(bf16)          # (4, T//4): the 4 stride phases
    w1 = w1_ref[...]                       # (C, 4) bf16 taps, C_in == 1
    b1 = b1_ref[...]                       # (C, 1) f32
    c = w1.shape[0]

    # ---- layer 1 (C_in=1, K=4, stride=2) on the MXU --------------------------
    # Even outputs h1[2t] use x[4t+k] = xq[k, t]; odd outputs h1[2t+1] use
    # x[4t+2+k] = {xq[2,t], xq[3,t], xq[0,t+1], xq[1,t+1]}.  Every slab is a
    # contiguous slice of the phase-split input.
    x_even = xq[:, 0:n_ph]                                              # (4, n_ph)
    x_odd = jnp.concatenate([xq[2:4, 0:n_ph], xq[0:2, 1:n_ph + 1]], axis=0)
    ph0 = jnp.maximum(jnp.dot(w1, x_even, preferred_element_type=f32) + b1, 0.0)
    ph1 = jnp.maximum(jnp.dot(w1, x_odd, preferred_element_type=f32) + b1, 0.0)

    # ---- layer 2 (K=4, stride=2): tap-accumulated matmuls (no im2col) --------
    # h2[:, t] = relu(b2 + sum_k W2_k @ h1[:, 2t+k]); h1[2t+k] is one of the
    # shifted ph0/ph1 slabs below.
    w2 = w2_ref[...]                                                    # (4, C, C) bf16
    taps2 = (ph0[:, 0:t2], ph1[:, 0:t2], ph0[:, 1:t2 + 1], ph1[:, 1:t2 + 1])
    acc = b2_ref[...]
    for k in range(4):
        acc = acc + jnp.dot(w2[k], taps2[k].astype(bf16),
                            preferred_element_type=f32)
    h = jnp.maximum(acc, 0.0)                                           # (C, T2) f32

    # Pad time once to the lane-dense width; every later matmul and the final
    # store are full 128-multiple lane slabs (columns >= t2 are don't-care and
    # get sliced off in the wrapper; causal convs never read to the right, so
    # the valid columns stay exact).
    h = jnp.concatenate([h, jnp.zeros((c, t_pad - t2), f32)], axis=1)   # (C, T_pad)

    # ---- layers 3,4: causal aggregator convs, tap-accumulated ---------------
    def causal_layer(hcur, w_taps_ref, b_ref):
        hp = jnp.concatenate([jnp.zeros((c, k3 - 1), bf16),
                              hcur.astype(bf16)], axis=1)               # causal left pad
        w = w_taps_ref[...]                                             # (k3, C, C) bf16
        a = b_ref[...]
        for k in range(k3):
            a = a + jnp.dot(w[k], hp[:, k:k + t_pad],
                            preferred_element_type=f32)
        return jnp.maximum(a, 0.0)                                      # (C, T_pad) f32

    h = causal_layer(h, w3_ref, b3_ref)
    h = causal_layer(h, w4_ref, b4_ref)

    # ---- layer 5: 1x1 top conv epilogue (no ReLU, no pooling in this module) -
    out = jnp.dot(w5_ref[...], h.astype(bf16),
                  preferred_element_type=f32) + b5_ref[...]
    o_ref[...] = out.astype(o_ref.dtype)            # (n_cls, T_pad) lane-dense store


# ---------------------------------------------------------------------------
# Wrapper: layout glue (phase split, per-tap weight stacking, bf16 cast) +
# a single pallas_call with a parallel batch grid.
# ---------------------------------------------------------------------------
def wav2vec_tuning_conv_forward(x, params):
    (w1, b1, s1), (w2, b2, s2) = params["extractor"]
    (w3, b3), (w4, b4) = params["aggregator"]
    w5, b5 = params["top"]

    x = jnp.squeeze(x, axis=1)                     # mimics x.squeeze() -> (B, T)
    B, T = x.shape
    C, _, K1 = w1.shape
    K2, K3 = w2.shape[2], w3.shape[2]
    n_cls = w5.shape[0]

    # the fused kernel is specialized to this (stride-2, stride-2, causal) stack
    assert (s1, s2) == (2, 2) and (K1, K2) == (4, 4)
    assert w4.shape[2] == K3 and w5.shape[2] == 1
    assert T % 4 == 0
    T1 = (T - K1) // s1 + 1                        # extractor conv0 output length
    T2 = (T1 - K2) // s2 + 1                       # extractor conv1 output length
    n_ph = T2 + 1                                  # h1 phase columns layer 2 needs
    Tq = T // 4
    assert T2 >= 1 and n_ph + 1 <= Tq
    T_pad = pl.cdiv(T2, 128) * 128                 # lane-dense output width

    # Wrapper-side layout glue (no FLOPs): phase-split the stride-2 input, stack
    # weights per tap, cast MXU operands to bf16.
    xq = x.reshape(B, Tq, 4).transpose(0, 2, 1)                   # xq[b,p,t] = x[b, 4t+p]
    bf16 = jnp.bfloat16
    w1_k = w1[:, 0, :].astype(bf16)                               # (C, 4)
    w2_k = jnp.transpose(w2, (2, 0, 1)).astype(bf16)              # (K2, C, C)
    w3_k = jnp.transpose(w3, (2, 0, 1)).astype(bf16)              # (K3, C, C)
    w4_k = jnp.transpose(w4, (2, 0, 1)).astype(bf16)              # (K3, C, C)
    w5_k = w5[:, :, 0].astype(bf16)                               # (n_cls, C)
    b1_k, b2_k, b3_k, b4_k, b5_k = [b.reshape(-1, 1).astype(jnp.float32)
                                    for b in (b1, b2, b3, b4, b5)]

    kernel = functools.partial(_fused_wav2vec_kernel,
                               t2=T2, n_ph=n_ph, k3=K3, t_pad=T_pad)

    const2 = lambda b: (0, 0)
    const3 = lambda b: (0, 0, 0)
    out_pad = pl.pallas_call(
        kernel,
        grid=(B,),
        in_specs=[
            pl.BlockSpec((None, 4, Tq), lambda b: (b, 0, 0)),     # per-batch phases
            pl.BlockSpec((C, K1), const2),                        # w1 taps
            pl.BlockSpec((C, 1), const2),                         # b1
            pl.BlockSpec((K2, C, C), const3),                     # w2 taps
            pl.BlockSpec((C, 1), const2),                         # b2
            pl.BlockSpec((K3, C, C), const3),                     # w3 taps
            pl.BlockSpec((C, 1), const2),                         # b3
            pl.BlockSpec((K3, C, C), const3),                     # w4 taps
            pl.BlockSpec((C, 1), const2),                         # b4
            pl.BlockSpec((n_cls, C), const2),                     # w5
            pl.BlockSpec((n_cls, 1), const2),                     # b5
        ],
        out_specs=pl.BlockSpec((None, n_cls, T_pad), lambda b: (b, 0, 0)),
        out_shape=jax.ShapeDtypeStruct((B, n_cls, T_pad), jnp.float32),
        compiler_params=pltpu.CompilerParams(
            dimension_semantics=("parallel",),        # batch steps are independent
            vmem_limit_bytes=32 * 1024 * 1024,        # size tile to 64 MiB on v7x at scale
        ),
    )(xq, w1_k, b1_k, w2_k, b2_k, w3_k, b3_k, w4_k, b4_k, w5_k, b5_k)

    # Drop the lane-padding columns; result is (B, n_cls, T2) NCW.
    return out_pad[:, :, :T2]


# ---------------------------------------------------------------------------
# Deterministic synthetic parameters (scaled-down wav2vec-style stacks).
# ---------------------------------------------------------------------------
def init_params(key, c=8, n_classes=4):
    def conv_param(key, co, ci, k):
        kw, kb = jax.random.split(key)
        w = 0.1 * jax.random.normal(kw, (co, ci, k), jnp.float32)
        b = 0.01 * jax.random.normal(kb, (co,), jnp.float32)
        return w, b

    keys = jax.random.split(key, 5)
    return {
        # feature_extractor: strided convs + ReLU (wav2vec-style, scaled down)
        "extractor": [
            conv_param(keys[0], c, 1, 4) + (2,),   # (w, b, stride)
            conv_param(keys[1], c, c, 4) + (2,),
        ],
        # feature_aggregator: causal, length-preserving convs + ReLU
        "aggregator": [
            conv_param(keys[2], c, c, 3),
            conv_param(keys[3], c, c, 3),
        ],
        # top_model: 1x1 conv classifier over time frames
        "top": conv_param(keys[4], n_classes, c, 1),
    }


# ---------------------------------------------------------------------------
# Pure-JAX reference (same math, layer-by-layer) used only to validate the
# fused Pallas kernel numerically.
# ---------------------------------------------------------------------------
def _ref_conv1d(x, w, b, stride=1, relu=False):
    B, Ci, T = x.shape
    Co, _, K = w.shape
    To = (T - K) // stride + 1
    cols = jnp.stack([x[:, :, k:k + stride * (To - 1) + 1:stride] for k in range(K)],
                     axis=1).reshape(B, K * Ci, To)
    wf = jnp.transpose(w, (0, 2, 1)).reshape(Co, K * Ci)
    y = jnp.einsum("ok,bkt->bot", wf, cols,
                   precision=jax.lax.Precision.HIGHEST) + b[None, :, None]
    return jnp.maximum(y, 0.0) if relu else y


def reference_forward(x, params):
    x = jnp.squeeze(x, axis=1)[:, None, :]
    for (w, b, s) in params["extractor"]:
        x = _ref_conv1d(x, w, b, stride=s, relu=True)
    for (w, b) in params["aggregator"]:
        k = w.shape[2]
        xp = jnp.pad(x, ((0, 0), (0, 0), (k - 1, 0)))   # causal pad
        x = _ref_conv1d(xp, w, b, stride=1, relu=True)
    w, b = params["top"]
    return _ref_conv1d(x, w, b, stride=1, relu=False)


if __name__ == "__main__":
    key = jax.random.PRNGKey(0)
    k_in, k_par = jax.random.split(key)

    B, T = 2, 64
    x = jax.random.normal(k_in, (B, 1, T), jnp.float32)   # (batch, 1, time)
    params = init_params(k_par, c=8, n_classes=4)

    out = jax.block_until_ready(wav2vec_tuning_conv_forward(x, params))
    ref = jax.block_until_ready(reference_forward(x, params))

    assert out.shape == (2, 4, 14), out.shape
    assert bool(jnp.all(jnp.isfinite(out)))
    max_err = float(jnp.max(jnp.abs(out - ref)))
    # bf16 MXU operands with f32 accumulation vs. Precision.HIGHEST f32 reference
    assert jnp.allclose(out, ref, rtol=5e-2, atol=2e-2), max_err
    print("KERNEL_OK")
</pallas_src>

<mosaic_0001>
module attributes {stable_mosaic.version = 11 : i64} {
  func.func @_fused_wav2vec_kernel(%arg0: i32, %arg1: memref<1x4x16xf32, #tpu.memory_space<vmem>>, %arg2: memref<8x4xbf16, #tpu.memory_space<vmem>>, %arg3: memref<8x1xf32, #tpu.memory_space<vmem>>, %arg4: memref<4x8x8xbf16, #tpu.memory_space<vmem>>, %arg5: memref<8x1xf32, #tpu.memory_space<vmem>>, %arg6: memref<3x8x8xbf16, #tpu.memory_space<vmem>>, %arg7: memref<8x1xf32, #tpu.memory_space<vmem>>, %arg8: memref<3x8x8xbf16, #tpu.memory_space<vmem>>, %arg9: memref<8x1xf32, #tpu.memory_space<vmem>>, %arg10: memref<4x8xbf16, #tpu.memory_space<vmem>>, %arg11: memref<4x1xf32, #tpu.memory_space<vmem>>, %arg12: memref<1x4x128xf32, #tpu.memory_space<vmem>>) attributes {dimension_semantics = [#tpu.dimension_semantics<parallel>], iteration_bounds = array<i64: 2>, scalar_prefetch = 0 : i64, scratch_operands = 0 : i64, tpu.core_type = #tpu.core_type<tc>, window_params = [{transform_indices = @transform_0, window_bounds = array<i64: 1, 4, 16>}, {pipeline_mode = #tpu.pipeline_mode<synchronous>, transform_indices = @transform_1, window_bounds = array<i64: 8, 4>}, {pipeline_mode = #tpu.pipeline_mode<synchronous>, transform_indices = @transform_2, window_bounds = array<i64: 8, 1>}, {pipeline_mode = #tpu.pipeline_mode<synchronous>, transform_indices = @transform_3, window_bounds = array<i64: 4, 8, 8>}, {pipeline_mode = #tpu.pipeline_mode<synchronous>, transform_indices = @transform_4, window_bounds = array<i64: 8, 1>}, {pipeline_mode = #tpu.pipeline_mode<synchronous>, transform_indices = @transform_5, window_bounds = array<i64: 3, 8, 8>}, {pipeline_mode = #tpu.pipeline_mode<synchronous>, transform_indices = @transform_6, window_bounds = array<i64: 8, 1>}, {pipeline_mode = #tpu.pipeline_mode<synchronous>, transform_indices = @transform_7, window_bounds = array<i64: 3, 8, 8>}, {pipeline_mode = #tpu.pipeline_mode<synchronous>, transform_indices = @transform_8, window_bounds = array<i64: 8, 1>}, {pipeline_mode = #tpu.pipeline_mode<synchronous>, transform_indices = @transform_9, window_bounds = array<i64: 4, 8>}, {pipeline_mode = #tpu.pipeline_mode<synchronous>, transform_indices = @transform_10, window_bounds = array<i64: 4, 1>}, {transform_indices = @transform_11, window_bounds = array<i64: 1, 4, 128>}]} {
    %c0 = arith.constant 0 : index
    %c0_0 = arith.constant 0 : index
    %c0_1 = arith.constant 0 : index
    %0 = vector.load %arg1[%c0, %c0_0, %c0_1] : memref<1x4x16xf32, #tpu.memory_space<vmem>>, vector<1x4x16xf32>
    %1 = vector.shape_cast %0 : vector<1x4x16xf32> to vector<4x16xf32>
    %2 = arith.truncf %1 : vector<4x16xf32> to vector<4x16xbf16>
    %c0_2 = arith.constant 0 : index
    %c0_3 = arith.constant 0 : index
    %3 = vector.load %arg2[%c0_2, %c0_3] : memref<8x4xbf16, #tpu.memory_space<vmem>>, vector<8x4xbf16>
    %c0_4 = arith.constant 0 : index
    %c0_5 = arith.constant 0 : index
    %4 = vector.load %arg3[%c0_4, %c0_5] : memref<8x1xf32, #tpu.memory_space<vmem>>, vector<8x1xf32>
    %5 = vector.extract_strided_slice %2 {offsets = [0, 0], sizes = [4, 15], strides = [1, 1]} : vector<4x16xbf16> to vector<4x15xbf16>
    %6 = vector.extract_strided_slice %2 {offsets = [2, 0], sizes = [2, 15], strides = [1, 1]} : vector<4x16xbf16> to vector<2x15xbf16>
    %7 = vector.extract_strided_slice %2 {offsets = [0, 1], sizes = [2, 15], strides = [1, 1]} : vector<4x16xbf16> to vector<2x15xbf16>
    %8 = tpu.concatenate %6, %7 in 0 : vector<2x15xbf16>, vector<2x15xbf16> -> vector<4x15xbf16>
    %cst = arith.constant dense<0.000000e+00> : vector<8x15xf32>
    %9 = tpu.matmul %3, %5, %cst {dimension_numbers = #tpu.dot_dimension_numbers<[1], [0], [0], [1], [0, 0, 1, 1], [], []>} : vector<8x4xbf16>, vector<4x15xbf16>, vector<8x15xf32> -> vector<8x15xf32>
    %10 = vector.broadcast %4 : vector<8x1xf32> to vector<8x15xf32>
    %11 = arith.addf %9, %10 : vector<8x15xf32>
    %cst_6 = arith.constant 0.000000e+00 : f32
    %12 = vector.broadcast %cst_6 : f32 to vector<8x15xf32>
    %13 = arith.maximumf %11, %12 : vector<8x15xf32>
    %cst_7 = arith.constant dense<0.000000e+00> : vector<8x15xf32>
    %14 = tpu.matmul %3, %8, %cst_7 {dimension_numbers = #tpu.dot_dimension_numbers<[1], [0], [0], [1], [0, 0, 1, 1], [], []>} : vector<8x4xbf16>, vector<4x15xbf16>, vector<8x15xf32> -> vector<8x15xf32>
    %15 = vector.broadcast %4 : vector<8x1xf32> to vector<8x15xf32>
    %16 = arith.addf %14, %15 : vector<8x15xf32>
    %cst_8 = arith.constant 0.000000e+00 : f32
    %17 = vector.broadcast %cst_8 : f32 to vector<8x15xf32>
    %18 = arith.maximumf %16, %17 : vector<8x15xf32>
    %c0_9 = arith.constant 0 : index
    %c0_10 = arith.constant 0 : index
    %c0_11 = arith.constant 0 : index
    %19 = vector.load %arg4[%c0_9, %c0_10, %c0_11] : memref<4x8x8xbf16, #tpu.memory_space<vmem>>, vector<4x8x8xbf16>
    %20 = vector.extract_strided_slice %13 {offsets = [0, 0], sizes = [8, 14], strides = [1, 1]} : vector<8x15xf32> to vector<8x14xf32>
    %21 = vector.extract_strided_slice %18 {offsets = [0, 0], sizes = [8, 14], strides = [1, 1]} : vector<8x15xf32> to vector<8x14xf32>
    %22 = vector.extract_strided_slice %13 {offsets = [0, 1], sizes = [8, 14], strides = [1, 1]} : vector<8x15xf32> to vector<8x14xf32>
    %23 = vector.extract_strided_slice %18 {offsets = [0, 1], sizes = [8, 14], strides = [1, 1]} : vector<8x15xf32> to vector<8x14xf32>
    %c0_12 = arith.constant 0 : index
    %c0_13 = arith.constant 0 : index
    %24 = vector.load %arg5[%c0_12, %c0_13] : memref<8x1xf32, #tpu.memory_space<vmem>>, vector<8x1xf32>
    %25 = vector.extract_strided_slice %19 {offsets = [0, 0, 0], sizes = [1, 8, 8], strides = [1, 1, 1]} : vector<4x8x8xbf16> to vector<1x8x8xbf16>
    %26 = vector.shape_cast %25 : vector<1x8x8xbf16> to vector<8x8xbf16>
    %27 = arith.truncf %20 : vector<8x14xf32> to vector<8x14xbf16>
    %cst_14 = arith.constant dense<0.000000e+00> : vector<8x14xf32>
    %28 = tpu.matmul %26, %27, %cst_14 {dimension_numbers = #tpu.dot_dimension_numbers<[1], [0], [0], [1], [0, 0, 1, 1], [], []>} : vector<8x8xbf16>, vector<8x14xbf16>, vector<8x14xf32> -> vector<8x14xf32>
    %29 = vector.broadcast %24 : vector<8x1xf32> to vector<8x14xf32>
    %30 = arith.addf %29, %28 : vector<8x14xf32>
    %31 = vector.extract_strided_slice %19 {offsets = [1, 0, 0], sizes = [1, 8, 8], strides = [1, 1, 1]} : vector<4x8x8xbf16> to vector<1x8x8xbf16>
    %32 = vector.shape_cast %31 : vector<1x8x8xbf16> to vector<8x8xbf16>
    %33 = arith.truncf %21 : vector<8x14xf32> to vector<8x14xbf16>
    %cst_15 = arith.constant dense<0.000000e+00> : vector<8x14xf32>
    %34 = tpu.matmul %32, %33, %cst_15 {dimension_numbers = #tpu.dot_dimension_numbers<[1], [0], [0], [1], [0, 0, 1, 1], [], []>} : vector<8x8xbf16>, vector<8x14xbf16>, vector<8x14xf32> -> vector<8x14xf32>
    %35 = arith.addf %30, %34 : vector<8x14xf32>
    %36 = vector.extract_strided_slice %19 {offsets = [2, 0, 0], sizes = [1, 8, 8], strides = [1, 1, 1]} : vector<4x8x8xbf16> to vector<1x8x8xbf16>
    %37 = vector.shape_cast %36 : vector<1x8x8xbf16> to vector<8x8xbf16>
    %38 = arith.truncf %22 : vector<8x14xf32> to vector<8x14xbf16>
    %cst_16 = arith.constant dense<0.000000e+00> : vector<8x14xf32>
    %39 = tpu.matmul %37, %38, %cst_16 {dimension_numbers = #tpu.dot_dimension_numbers<[1], [0], [0], [1], [0, 0, 1, 1], [], []>} : vector<8x8xbf16>, vector<8x14xbf16>, vector<8x14xf32> -> vector<8x14xf32>
    %40 = arith.addf %35, %39 : vector<8x14xf32>
    %41 = vector.extract_strided_slice %19 {offsets = [3, 0, 0], sizes = [1, 8, 8], strides = [1, 1, 1]} : vector<4x8x8xbf16> to vector<1x8x8xbf16>
    %42 = vector.shape_cast %41 : vector<1x8x8xbf16> to vector<8x8xbf16>
    %43 = arith.truncf %23 : vector<8x14xf32> to vector<8x14xbf16>
    %cst_17 = arith.constant dense<0.000000e+00> : vector<8x14xf32>
    %44 = tpu.matmul %42, %43, %cst_17 {dimension_numbers = #tpu.dot_dimension_numbers<[1], [0], [0], [1], [0, 0, 1, 1], [], []>} : vector<8x8xbf16>, vector<8x14xbf16>, vector<8x14xf32> -> vector<8x14xf32>
    %45 = arith.addf %40, %44 : vector<8x14xf32>
    %cst_18 = arith.constant 0.000000e+00 : f32
    %46 = vector.broadcast %cst_18 : f32 to vector<8x14xf32>
    %47 = arith.maximumf %45, %46 : vector<8x14xf32>
    %cst_19 = arith.constant 0.000000e+00 : f32
    %48 = vector.broadcast %cst_19 : f32 to vector<8x114xf32>
    %49 = tpu.concatenate %47, %48 in 1 : vector<8x14xf32>, vector<8x114xf32> -> vector<8x128xf32>
    %cst_20 = arith.constant 0.000000e+00 : bf16
    %50 = vector.broadcast %cst_20 : bf16 to vector<8x2xbf16>
    %51 = arith.truncf %49 : vector<8x128xf32> to vector<8x128xbf16>
    %52 = tpu.concatenate %50, %51 in 1 : vector<8x2xbf16>, vector<8x128xbf16> -> vector<8x130xbf16>
    %c0_21 = arith.constant 0 : index
    %c0_22 = arith.constant 0 : index
    %c0_23 = arith.constant 0 : index
    %53 = vector.load %arg6[%c0_21, %c0_22, %c0_23] : memref<3x8x8xbf16, #tpu.memory_space<vmem>>, vector<3x8x8xbf16>
    %c0_24 = arith.constant 0 : index
    %c0_25 = arith.constant 0 : index
    %54 = vector.load %arg7[%c0_24, %c0_25] : memref<8x1xf32, #tpu.memory_space<vmem>>, vector<8x1xf32>
    %55 = vector.extract_strided_slice %53 {offsets = [0, 0, 0], sizes = [1, 8, 8], strides = [1, 1, 1]} : vector<3x8x8xbf16> to vector<1x8x8xbf16>
    %56 = vector.shape_cast %55 : vector<1x8x8xbf16> to vector<8x8xbf16>
    %57 = vector.extract_strided_slice %52 {offsets = [0, 0], sizes = [8, 128], strides = [1, 1]} : vector<8x130xbf16> to vector<8x128xbf16>
    %cst_26 = arith.constant dense<0.000000e+00> : vector<8x128xf32>
    %58 = tpu.matmul %56, %57, %cst_26 {dimension_numbers = #tpu.dot_dimension_numbers<[1], [0], [0], [1], [0, 0, 1, 1], [], []>} : vector<8x8xbf16>, vector<8x128xbf16>, vector<8x128xf32> -> vector<8x128xf32>
    %59 = vector.broadcast %54 : vector<8x1xf32> to vector<8x128xf32>
    %60 = arith.addf %59, %58 : vector<8x128xf32>
    %61 = vector.extract_strided_slice %53 {offsets = [1, 0, 0], sizes = [1, 8, 8], strides = [1, 1, 1]} : vector<3x8x8xbf16> to vector<1x8x8xbf16>
    %62 = vector.shape_cast %61 : vector<1x8x8xbf16> to vector<8x8xbf16>
    %63 = vector.extract_strided_slice %52 {offsets = [0, 1], sizes = [8, 128], strides = [1, 1]} : vector<8x130xbf16> to vector<8x128xbf16>
    %cst_27 = arith.constant dense<0.000000e+00> : vector<8x128xf32>
    %64 = tpu.matmul %62, %63, %cst_27 {dimension_numbers = #tpu.dot_dimension_numbers<[1], [0], [0], [1], [0, 0, 1, 1], [], []>} : vector<8x8xbf16>, vector<8x128xbf16>, vector<8x128xf32> -> vector<8x128xf32>
    %65 = arith.addf %60, %64 : vector<8x128xf32>
    %66 = vector.extract_strided_slice %53 {offsets = [2, 0, 0], sizes = [1, 8, 8], strides = [1, 1, 1]} : vector<3x8x8xbf16> to vector<1x8x8xbf16>
    %67 = vector.shape_cast %66 : vector<1x8x8xbf16> to vector<8x8xbf16>
    %68 = vector.extract_strided_slice %52 {offsets = [0, 2], sizes = [8, 128], strides = [1, 1]} : vector<8x130xbf16> to vector<8x128xbf16>
    %cst_28 = arith.constant dense<0.000000e+00> : vector<8x128xf32>
    %69 = tpu.matmul %67, %68, %cst_28 {dimension_numbers = #tpu.dot_dimension_numbers<[1], [0], [0], [1], [0, 0, 1, 1], [], []>} : vector<8x8xbf16>, vector<8x128xbf16>, vector<8x128xf32> -> vector<8x128xf32>
    %70 = arith.addf %65, %69 : vector<8x128xf32>
    %cst_29 = arith.constant 0.000000e+00 : f32
    %71 = vector.broadcast %cst_29 : f32 to vector<8x128xf32>
    %72 = arith.maximumf %70, %71 : vector<8x128xf32>
    %cst_30 = arith.constant 0.000000e+00 : bf16
    %73 = vector.broadcast %cst_30 : bf16 to vector<8x2xbf16>
    %74 = arith.truncf %72 : vector<8x128xf32> to vector<8x128xbf16>
    %75 = tpu.concatenate %73, %74 in 1 : vector<8x2xbf16>, vector<8x128xbf16> -> vector<8x130xbf16>
    %c0_31 = arith.constant 0 : index
    %c0_32 = arith.constant 0 : index
    %c0_33 = arith.constant 0 : index
    %76 = vector.load %arg8[%c0_31, %c0_32, %c0_33] : memref<3x8x8xbf16, #tpu.memory_space<vmem>>, vector<3x8x8xbf16>
    %c0_34 = arith.constant 0 : index
    %c0_35 = arith.constant 0 : index
    %77 = vector.load %arg9[%c0_34, %c0_35] : memref<8x1xf32, #tpu.memory_space<vmem>>, vector<8x1xf32>
    %78 = vector.extract_strided_slice %76 {offsets = [0, 0, 0], sizes = [1, 8, 8], strides = [1, 1, 1]} : vector<3x8x8xbf16> to vector<1x8x8xbf16>
    %79 = vector.shape_cast %78 : vector<1x8x8xbf16> to vector<8x8xbf16>
    %80 = vector.extract_strided_slice %75 {offsets = [0, 0], sizes = [8, 128], strides = [1, 1]} : vector<8x130xbf16> to vector<8x128xbf16>
    %cst_36 = arith.constant dense<0.000000e+00> : vector<8x128xf32>
    %81 = tpu.matmul %79, %80, %cst_36 {dimension_numbers = #tpu.dot_dimension_numbers<[1], [0], [0], [1], [0, 0, 1, 1], [], []>} : vector<8x8xbf16>, vector<8x128xbf16>, vector<8x128xf32> -> vector<8x128xf32>
    %82 = vector.broadcast %77 : vector<8x1xf32> to vector<8x128xf32>
    %83 = arith.addf %82, %81 : vector<8x128xf32>
    %84 = vector.extract_strided_slice %76 {offsets = [1, 0, 0], sizes = [1, 8, 8], strides = [1, 1, 1]} : vector<3x8x8xbf16> to vector<1x8x8xbf16>
    %85 = vector.shape_cast %84 : vector<1x8x8xbf16> to vector<8x8xbf16>
    %86 = vector.extract_strided_slice %75 {offsets = [0, 1], sizes = [8, 128], strides = [1, 1]} : vector<8x130xbf16> to vector<8x128xbf16>
    %cst_37 = arith.constant dense<0.000000e+00> : vector<8x128xf32>
    %87 = tpu.matmul %85, %86, %cst_37 {dimension_numbers = #tpu.dot_dimension_numbers<[1], [0], [0], [1], [0, 0, 1, 1], [], []>} : vector<8x8xbf16>, vector<8x128xbf16>, vector<8x128xf32> -> vector<8x128xf32>
    %88 = arith.addf %83, %87 : vector<8x128xf32>
    %89 = vector.extract_strided_slice %76 {offsets = [2, 0, 0], sizes = [1, 8, 8], strides = [1, 1, 1]} : vector<3x8x8xbf16> to vector<1x8x8xbf16>
    %90 = vector.shape_cast %89 : vector<1x8x8xbf16> to vector<8x8xbf16>
    %91 = vector.extract_strided_slice %75 {offsets = [0, 2], sizes = [8, 128], strides = [1, 1]} : vector<8x130xbf16> to vector<8x128xbf16>
    %cst_38 = arith.constant dense<0.000000e+00> : vector<8x128xf32>
    %92 = tpu.matmul %90, %91, %cst_38 {dimension_numbers = #tpu.dot_dimension_numbers<[1], [0], [0], [1], [0, 0, 1, 1], [], []>} : vector<8x8xbf16>, vector<8x128xbf16>, vector<8x128xf32> -> vector<8x128xf32>
    %93 = arith.addf %88, %92 : vector<8x128xf32>
    %cst_39 = arith.constant 0.000000e+00 : f32
    %94 = vector.broadcast %cst_39 : f32 to vector<8x128xf32>
    %95 = arith.maximumf %93, %94 : vector<8x128xf32>
    %c0_40 = arith.constant 0 : index
    %c0_41 = arith.constant 0 : index
    %96 = vector.load %arg10[%c0_40, %c0_41] : memref<4x8xbf16, #tpu.memory_space<vmem>>, vector<4x8xbf16>
    %97 = arith.truncf %95 : vector<8x128xf32> to vector<8x128xbf16>
    %cst_42 = arith.constant dense<0.000000e+00> : vector<4x128xf32>
    %98 = tpu.matmul %96, %97, %cst_42 {dimension_numbers = #tpu.dot_dimension_numbers<[1], [0], [0], [1], [0, 0, 1, 1], [], []>} : vector<4x8xbf16>, vector<8x128xbf16>, vector<4x128xf32> -> vector<4x128xf32>
    %c0_43 = arith.constant 0 : index
    %c0_44 = arith.constant 0 : index
    %99 = vector.load %arg11[%c0_43, %c0_44] : memref<4x1xf32, #tpu.memory_space<vmem>>, vector<4x1xf32>
    %100 = vector.broadcast %99 : vector<4x1xf32> to vector<4x128xf32>
    %101 = arith.addf %98, %100 : vector<4x128xf32>
    %c0_45 = arith.constant 0 : index
    %c0_46 = arith.constant 0 : index
    %c0_47 = arith.constant 0 : index
    %102 = vector.load %arg12[%c0_45, %c0_46, %c0_47] : memref<1x4x128xf32, #tpu.memory_space<vmem>>, vector<1x4x128xf32>
    %103 = vector.shape_cast %102 : vector<1x4x128xf32> to vector<4x128xf32>
    %104 = vector.shape_cast %101 : vector<4x128xf32> to vector<1x4x128xf32>
    tpu.vector_store %arg12[%c0_45, %c0_46, %c0_47], %104 {strides = array<i32>} : memref<1x4x128xf32, #tpu.memory_space<vmem>>, vector<1x4x128xf32>,
    return
  }
  func.func @transform_0(%arg0: i32) -> (i32, i32, i32) {
    %c0_i32 = arith.constant 0 : i32
    %c0_i32_0 = arith.constant 0 : i32
    %c0_i32_1 = arith.constant 0 : i32
    return %arg0, %c0_i32, %c0_i32_0 : i32, i32, i32
  }
  func.func @transform_1(%arg0: i32) -> (i32, i32) {
    %c0_i32 = arith.constant 0 : i32
    %c0_i32_0 = arith.constant 0 : i32
    %c0_i32_1 = arith.constant 0 : i32
    return %c0_i32, %c0_i32_0 : i32, i32
  }
  func.func @transform_2(%arg0: i32) -> (i32, i32) {
    %c0_i32 = arith.constant 0 : i32
    %c0_i32_0 = arith.constant 0 : i32
    %c0_i32_1 = arith.constant 0 : i32
    return %c0_i32, %c0_i32_0 : i32, i32
  }
  func.func @transform_3(%arg0: i32) -> (i32, i32, i32) {
    %c0_i32 = arith.constant 0 : i32
    %c0_i32_0 = arith.constant 0 : i32
    %c0_i32_1 = arith.constant 0 : i32
    %c0_i32_2 = arith.constant 0 : i32
    return %c0_i32, %c0_i32_0, %c0_i32_1 : i32, i32, i32
  }
  func.func @transform_4(%arg0: i32) -> (i32, i32) {
    %c0_i32 = arith.constant 0 : i32
    %c0_i32_0 = arith.constant 0 : i32
    %c0_i32_1 = arith.constant 0 : i32
    return %c0_i32, %c0_i32_0 : i32, i32
  }
  func.func @transform_5(%arg0: i32) -> (i32, i32, i32) {
    %c0_i32 = arith.constant 0 : i32
    %c0_i32_0 = arith.constant 0 : i32
    %c0_i32_1 = arith.constant 0 : i32
    %c0_i32_2 = arith.constant 0 : i32
    return %c0_i32, %c0_i32_0, %c0_i32_1 : i32, i32, i32
  }
  func.func @transform_6(%arg0: i32) -> (i32, i32) {
    %c0_i32 = arith.constant 0 : i32
    %c0_i32_0 = arith.constant 0 : i32
    %c0_i32_1 = arith.constant 0 : i32
    return %c0_i32, %c0_i32_0 : i32, i32
  }
  func.func @transform_7(%arg0: i32) -> (i32, i32, i32) {
    %c0_i32 = arith.constant 0 : i32
    %c0_i32_0 = arith.constant 0 : i32
    %c0_i32_1 = arith.constant 0 : i32
    %c0_i32_2 = arith.constant 0 : i32
    return %c0_i32, %c0_i32_0, %c0_i32_1 : i32, i32, i32
  }
  func.func @transform_8(%arg0: i32) -> (i32, i32) {
    %c0_i32 = arith.constant 0 : i32
    %c0_i32_0 = arith.constant 0 : i32
    %c0_i32_1 = arith.constant 0 : i32
    return %c0_i32, %c0_i32_0 : i32, i32
  }
  func.func @transform_9(%arg0: i32) -> (i32, i32) {
    %c0_i32 = arith.constant 0 : i32
    %c0_i32_0 = arith.constant 0 : i32
    %c0_i32_1 = arith.constant 0 : i32
    return %c0_i32, %c0_i32_0 : i32, i32
  }
  func.func @transform_10(%arg0: i32) -> (i32, i32) {
    %c0_i32 = arith.constant 0 : i32
    %c0_i32_0 = arith.constant 0 : i32
    %c0_i32_1 = arith.constant 0 : i32
    return %c0_i32, %c0_i32_0 : i32, i32
  }
  func.func @transform_11(%arg0: i32) -> (i32, i32, i32) {
    %c0_i32 = arith.constant 0 : i32
    %c0_i32_0 = arith.constant 0 : i32
    %c0_i32_1 = arith.constant 0 : i32
    return %arg0, %c0_i32, %c0_i32_0 : i32, i32, i32
  }
}

</mosaic_0001>

<llo_original>
// kernel: tpu_custom_call.1
$region0: #{tpu_custom_call.1}
  #allocation0 [shape = 'u32[]', space=smem, size = 0x4, offset = 0x4, fixed_abs, tag = 'smem constant byte address 0x4 - core index']
  #allocation1 [shape = 'u32[144,128]{1,0:T(1,128)}', space=vmem, size = 0x12000, scoped, tag = 'internal scratch']
  %s0 = inlined_call_operand.hbm [shape: f32[2,4,16], index: 0, kind: input, shape index: {}]
  %s1 = inlined_call_operand.vmem [shape: bf16[8,4], index: 1, kind: input, shape index: {}]
  %s2 = inlined_call_operand.vmem [shape: f32[8,1], index: 2, kind: input, shape index: {}]
  %s3 = inlined_call_operand.vmem [shape: bf16[4,8,8], index: 3, kind: input, shape index: {}]
  %s4 = inlined_call_operand.vmem [shape: f32[8,1], index: 4, kind: input, shape index: {}]
  %s5 = inlined_call_operand.vmem [shape: bf16[3,8,8], index: 5, kind: input, shape index: {}]
  %s6 = inlined_call_operand.vmem [shape: f32[8,1], index: 6, kind: input, shape index: {}]
  %s7 = inlined_call_operand.vmem [shape: bf16[3,8,8], index: 7, kind: input, shape index: {}]
  %s8 = inlined_call_operand.vmem [shape: f32[8,1], index: 8, kind: input, shape index: {}]
  %s9 = inlined_call_operand.vmem [shape: bf16[4,8], index: 9, kind: input, shape index: {}]
  %s10 = inlined_call_operand.vmem [shape: f32[4,1], index: 10, kind: input, shape index: {}]
  %s11 = inlined_call_operand.hbm [shape: f32[2,4,128], index: 11, kind: output, shape index: {}]
  %s12 = sld [smem:[#allocation0]]
  $region81: #{tpu_custom_call.1} parent=0
    _
  %s14 = ssub.s32 1, %s12
  %s15 = scalar_select 0, %s14, %s12
  $region1: #{tpu_custom_call.1} parent=0
    #allocation2 [shape = 'u8[4096]{0}', space=vmem, size = 0x1000, scoped, tag = 'input window, operand 0']
    #allocation3 [shape = 's32[2]{0}', space=sflag, size = 0x8, scoped, tag = 'scoped memory for tpu_custom_call.1']
    #allocation4 [shape = 's32[2]{0}', space=sflag, size = 0x8, scoped, tag = 'scoped memory for tpu_custom_call.1']
    #allocation5 [shape = 'u8[4096]{0}', space=vmem, size = 0x1000, scoped, tag = 'output window, operand 0']
    %16 = vsyncpa [#allocation3], 0
    %s17 = scalar_lea.sflag [#allocation3], 1
    %18 = vsyncpa %s17, 0
    %19 = vsyncpa [#allocation4], 0
    %s20 = scalar_lea.sflag [#allocation4], 1
    %21 = vsyncpa %s20, 0
    loop: start=0, step=1, limit=4
    $region2: #{tpu_custom_call.1} parent=1 // loop_pre_header
      _
    $region3: #{tpu_custom_call.1} parent=1 // loop_header
      %s23 = sphi 0, %s27
      %p24 = scmp.ge.s32.totalorder %s23, 4
      %s33 = sphi 0, %s35
      %s36 = sphi 0, %s33
      %s37 = sphi 0, %s36
      %s53 = sphi 0, %s37
      %s57 = sphi 0, %s57
      %s59 = sphi 0, %s57
      %s60 = sphi 0, %s59
      %s74 = sphi 0, %s60
      %s78 = sphi 0, %s78
      %s80 = sphi 0, %s78
      %s81 = sphi 0, %s80
      %s95 = sphi 0, %s81
      %s99 = sphi 0, %s99
      %s101 = sphi 0, %s99
      %s102 = sphi 0, %s101
      %s116 = sphi 0, %s102
      %s120 = sphi 0, %s120
      %s122 = sphi 0, %s120
      %s123 = sphi 0, %s122
      %s137 = sphi 0, %s123
      %s141 = sphi 0, %s141
      %s143 = sphi 0, %s141
      %s144 = sphi 0, %s143
      %s158 = sphi 0, %s144
      %s162 = sphi 0, %s162
      %s164 = sphi 0, %s162
      %s165 = sphi 0, %s164
      %s179 = sphi 0, %s165
      %s183 = sphi 0, %s183
      %s185 = sphi 0, %s183
      %s186 = sphi 0, %s185
      %s200 = sphi 0, %s186
      %s204 = sphi 0, %s204
      %s206 = sphi 0, %s204
      %s207 = sphi 0, %s206
      %s221 = sphi 0, %s207
      %s225 = sphi 0, %s225
      %s227 = sphi 0, %s225
      %s228 = sphi 0, %s227
      %s242 = sphi 0, %s228
      %s246 = sphi 0, %s246
      %s248 = sphi 0, %s246
      %s249 = sphi 0, %s248
      %s263 = sphi 0, %s249
      %s269 = sphi 0, %s271
      %s272 = sphi 0, %s269
      %s273 = sphi 0, %s272
      %s289 = sphi 0, %s273
    $region4: #{tpu_custom_call.1} parent=1 // loop_header_branch
      %26 = sbr.rel (%p24) target = $region8
    $region5: #{tpu_custom_call.1} parent=1 // loop_body
      %s28 = ssub.s32 %s23, 1
      %s29 = ssub.s32 %s23, 2
      %s30 = sadd.s32 %s23, 1
      %s31 = ssub.s32 %s23, %s30
      %p32 = scmp.eq.s32.totalorder %s31, 0
      %s34 = sadd.s32 %s33, 1
      %s35 = scalar_select %p32, %s33, %s34
      %p38 = pneg %p32
      %p39 = scmp.eq.s32.totalorder %s23, 1
      %p40 = por %p38, %p39
      %p41 = scmp.ne.s32.totalorder %s33, %s36
      %p42 = scmp.eq.s32.totalorder %s23, 0
      %p43 = por %p41, %p42
      %p44 = scmp.ne.s32.totalorder %s33, %s36
      %p45 = scmp.eq.s32.totalorder %s28, 1
      %p46 = por %p44, %p45
      %p47 = scmp.ne.s32.totalorder %s36, %s37
      %p48 = scmp.eq.s32.totalorder %s28, 0
      %p49 = por %p47, %p48
      %p50 = scmp.ne.s32.totalorder %s36, %s37
      %p51 = scmp.eq.s32.totalorder %s29, 1
      %p52 = por %p50, %p51
      %p54 = scmp.ne.s32.totalorder %s37, %s53
      %p55 = scmp.eq.s32.totalorder %s29, 0
      %p56 = por %p54, %p55
      %s58 = sadd.s32 %s57, 1
      %p61 = scmp.eq.s32.totalorder %s23, 1
      %p62 = scmp.ne.s32.totalorder %s57, %s59
      %p63 = scmp.eq.s32.totalorder %s23, 0
      %p64 = por %p62, %p63
      %p65 = scmp.ne.s32.totalorder %s57, %s59
      %p66 = scmp.eq.s32.totalorder %s28, 1
      %p67 = por %p65, %p66
      %p68 = scmp.ne.s32.totalorder %s59, %s60
      %p69 = scmp.eq.s32.totalorder %s28, 0
      %p70 = por %p68, %p69
      %p71 = scmp.ne.s32.totalorder %s59, %s60
      %p72 = scmp.eq.s32.totalorder %s29, 1
      %p73 = por %p71, %p72
      %p75 = scmp.ne.s32.totalorder %s60, %s74
      %p76 = scmp.eq.s32.totalorder %s29, 0
      %p77 = por %p75, %p76
      %s79 = sadd.s32 %s78, 1
      %p82 = scmp.eq.s32.totalorder %s23, 1
      %p83 = scmp.ne.s32.totalorder %s78, %s80
      %p84 = scmp.eq.s32.totalorder %s23, 0
      %p85 = por %p83, %p84
      %p86 = scmp.ne.s32.totalorder %s78, %s80
      %p87 = scmp.eq.s32.totalorder %s28, 1
      %p88 = por %p86, %p87
      %p89 = scmp.ne.s32.totalorder %s80, %s81
      %p90 = scmp.eq.s32.totalorder %s28, 0
      %p91 = por %p89, %p90
      %p92 = scmp.ne.s32.totalorder %s80, %s81
      %p93 = scmp.eq.s32.totalorder %s29, 1
      %p94 = por %p92, %p93
      %p96 = scmp.ne.s32.totalorder %s81, %s95
      %p97 = scmp.eq.s32.totalorder %s29, 0
      %p98 = por %p96, %p97
      %s100 = sadd.s32 %s99, 1
      %p103 = scmp.eq.s32.totalorder %s23, 1
      %p104 = scmp.ne.s32.totalorder %s99, %s101
      %p105 = scmp.eq.s32.totalorder %s23, 0
      %p106 = por %p104, %p105
      %p107 = scmp.ne.s32.totalorder %s99, %s101
      %p108 = scmp.eq.s32.totalorder %s28, 1
      %p109 = por %p107, %p108
      %p110 = scmp.ne.s32.totalorder %s101, %s102
      %p111 = scmp.eq.s32.totalorder %s28, 0
      %p112 = por %p110, %p111
      %p113 = scmp.ne.s32.totalorder %s101, %s102
      %p114 = scmp.eq.s32.totalorder %s29, 1
      %p115 = por %p113, %p114
      %p117 = scmp.ne.s32.totalorder %s102, %s116
      %p118 = scmp.eq.s32.totalorder %s29, 0
      %p119 = por %p117, %p118
      %s121 = sadd.s32 %s120, 1
      %p124 = scmp.eq.s32.totalorder %s23, 1
      %p125 = scmp.ne.s32.totalorder %s120, %s122
      %p126 = scmp.eq.s32.totalorder %s23, 0
      %p127 = por %p125, %p126
      %p128 = scmp.ne.s32.totalorder %s120, %s122
      %p129 = scmp.eq.s32.totalorder %s28, 1
      %p130 = por %p128, %p129
      %p131 = scmp.ne.s32.totalorder %s122, %s123
      %p132 = scmp.eq.s32.totalorder %s28, 0
      %p133 = por %p131, %p132
      %p134 = scmp.ne.s32.totalorder %s122, %s123
      %p135 = scmp.eq.s32.totalorder %s29, 1
      %p136 = por %p134, %p135
      %p138 = scmp.ne.s32.totalorder %s123, %s137
      %p139 = scmp.eq.s32.totalorder %s29, 0
      %p140 = por %p138, %p139
      %s142 = sadd.s32 %s141, 1
      %p145 = scmp.eq.s32.totalorder %s23, 1
      %p146 = scmp.ne.s32.totalorder %s141, %s143
      %p147 = scmp.eq.s32.totalorder %s23, 0
      %p148 = por %p146, %p147
      %p149 = scmp.ne.s32.totalorder %s141, %s143
      %p150 = scmp.eq.s32.totalorder %s28, 1
      %p151 = por %p149, %p150
      %p152 = scmp.ne.s32.totalorder %s143, %s144
      %p153 = scmp.eq.s32.totalorder %s28, 0
      %p154 = por %p152, %p153
      %p155 = scmp.ne.s32.totalorder %s143, %s144
      %p156 = scmp.eq.s32.totalorder %s29, 1
      %p157 = por %p155, %p156
      %p159 = scmp.ne.s32.totalorder %s144, %s158
      %p160 = scmp.eq.s32.totalorder %s29, 0
      %p161 = por %p159, %p160
      %s163 = sadd.s32 %s162, 1
      %p166 = scmp.eq.s32.totalorder %s23, 1
      %p167 = scmp.ne.s32.totalorder %s162, %s164
      %p168 = scmp.eq.s32.totalorder %s23, 0
      %p169 = por %p167, %p168
      %p170 = scmp.ne.s32.totalorder %s162, %s164
      %p171 = scmp.eq.s32.totalorder %s28, 1
      %p172 = por %p170, %p171
      %p173 = scmp.ne.s32.totalorder %s164, %s165
      %p174 = scmp.eq.s32.totalorder %s28, 0
      %p175 = por %p173, %p174
      %p176 = scmp.ne.s32.totalorder %s164, %s165
      %p177 = scmp.eq.s32.totalorder %s29, 1
      %p178 = por %p176, %p177
      %p180 = scmp.ne.s32.totalorder %s165, %s179
      %p181 = scmp.eq.s32.totalorder %s29, 0
      %p182 = por %p180, %p181
      %s184 = sadd.s32 %s183, 1
      %p187 = scmp.eq.s32.totalorder %s23, 1
      %p188 = scmp.ne.s32.totalorder %s183, %s185
      %p189 = scmp.eq.s32.totalorder %s23, 0
      %p190 = por %p188, %p189
      %p191 = scmp.ne.s32.totalorder %s183, %s185
      %p192 = scmp.eq.s32.totalorder %s28, 1
      %p193 = por %p191, %p192
      %p194 = scmp.ne.s32.totalorder %s185, %s186
      %p195 = scmp.eq.s32.totalorder %s28, 0
      %p196 = por %p194, %p195
      %p197 = scmp.ne.s32.totalorder %s185, %s186
      %p198 = scmp.eq.s32.totalorder %s29, 1
      %p199 = por %p197, %p198
      %p201 = scmp.ne.s32.totalorder %s186, %s200
      %p202 = scmp.eq.s32.totalorder %s29, 0
      %p203 = por %p201, %p202
      %s205 = sadd.s32 %s204, 1
      %p208 = scmp.eq.s32.totalorder %s23, 1
      %p209 = scmp.ne.s32.totalorder %s204, %s206
      %p210 = scmp.eq.s32.totalorder %s23, 0
      %p211 = por %p209, %p210
      %p212 = scmp.ne.s32.totalorder %s204, %s206
      %p213 = scmp.eq.s32.totalorder %s28, 1
      %p214 = por %p212, %p213
      %p215 = scmp.ne.s32.totalorder %s206, %s207
      %p216 = scmp.eq.s32.totalorder %s28, 0
      %p217 = por %p215, %p216
      %p218 = scmp.ne.s32.totalorder %s206, %s207
      %p219 = scmp.eq.s32.totalorder %s29, 1
      %p220 = por %p218, %p219
      %p222 = scmp.ne.s32.totalorder %s207, %s221
      %p223 = scmp.eq.s32.totalorder %s29, 0
      %p224 = por %p222, %p223
      %s226 = sadd.s32 %s225, 1
      %p229 = scmp.eq.s32.totalorder %s23, 1
      %p230 = scmp.ne.s32.totalorder %s225, %s227
      %p231 = scmp.eq.s32.totalorder %s23, 0
      %p232 = por %p230, %p231
      %p233 = scmp.ne.s32.totalorder %s225, %s227
      %p234 = scmp.eq.s32.totalorder %s28, 1
      %p235 = por %p233, %p234
      %p236 = scmp.ne.s32.totalorder %s227, %s228
      %p237 = scmp.eq.s32.totalorder %s28, 0
      %p238 = por %p236, %p237
      %p239 = scmp.ne.s32.totalorder %s227, %s228
      %p240 = scmp.eq.s32.totalorder %s29, 1
      %p241 = por %p239, %p240
      %p243 = scmp.ne.s32.totalorder %s228, %s242
      %p244 = scmp.eq.s32.totalorder %s29, 0
      %p245 = por %p243, %p244
      %s247 = sadd.s32 %s246, 1
      %p250 = scmp.eq.s32.totalorder %s23, 1
      %p251 = scmp.ne.s32.totalorder %s246, %s248
      %p252 = scmp.eq.s32.totalorder %s23, 0
      %p253 = por %p251, %p252
      %p254 = scmp.ne.s32.totalorder %s246, %s248
      %p255 = scmp.eq.s32.totalorder %s28, 1
      %p256 = por %p254, %p255
      %p257 = scmp.ne.s32.totalorder %s248, %s249
      %p258 = scmp.eq.s32.totalorder %s28, 0
      %p259 = por %p257, %p258
      %p260 = scmp.ne.s32.totalorder %s248, %s249
      %p261 = scmp.eq.s32.totalorder %s29, 1
      %p262 = por %p260, %p261
      %p264 = scmp.ne.s32.totalorder %s249, %s263
      %p265 = scmp.eq.s32.totalorder %s29, 0
      %p266 = por %p264, %p265
      %s267 = ssub.s32 %s23, %s30
      %p268 = scmp.eq.s32.totalorder %s267, 0
      %s270 = sadd.s32 %s269, 1
      %s271 = scalar_select %p268, %s269, %s270
      %p274 = pneg %p268
      %p275 = scmp.eq.s32.totalorder %s23, 1
      %p276 = por %p274, %p275
      %p277 = scmp.ne.s32.totalorder %s269, %s272
      %p278 = scmp.eq.s32.totalorder %s23, 0
      %p279 = por %p277, %p278
      %p280 = scmp.ne.s32.totalorder %s269, %s272
      %p281 = scmp.eq.s32.totalorder %s28, 1
      %p282 = por %p280, %p281
      %p283 = scmp.ne.s32.totalorder %s272, %s273
      %p284 = scmp.eq.s32.totalorder %s28, 0
      %p285 = por %p283, %p284
      %p286 = scmp.ne.s32.totalorder %s272, %s273
      %p287 = scmp.eq.s32.totalorder %s29, 1
      %p288 = por %p286, %p287
      %p290 = scmp.ne.s32.totalorder %s273, %s289
      %p291 = scmp.eq.s32.totalorder %s29, 0
      %p292 = por %p290, %p291
      %p293 = scmp.le.s32.totalorder 1, %s23
      %p294 = scmp.lt.s32.totalorder %s23, 3
      %p295 = pnand %p293, %p294
      %p296 = pneg %p295
      // Predicated region
      $region9: #{tpu_custom_call.1} parent=5 // pred_check
        _
      $region10: #{tpu_custom_call.1} parent=5 // pred_check_branch
        %298 = sbr.rel (%p295) target = $region12
      $region11: #{tpu_custom_call.1} parent=5 // pred_region
        %s299 = ssub.s32 %s23, 1
        // Predicated region
        $region13: #{tpu_custom_call.1} parent=11 // pred_check
          %p300 = pneg %p70
        $region14: #{tpu_custom_call.1} parent=11 // pred_check_branch
          %302 = sbr.rel (%p300) target = $region16
        $region15: #{tpu_custom_call.1} parent=11 // pred_region
          _
        $region16: #{tpu_custom_call.1} parent=11 // pred_fallthru
          _
        // Predicated region
        $region17: #{tpu_custom_call.1} parent=11 // pred_check
          %p303 = pneg %p91
        $region18: #{tpu_custom_call.1} parent=11 // pred_check_branch
          %305 = sbr.rel (%p303) target = $region20
        $region19: #{tpu_custom_call.1} parent=11 // pred_region
          _
        $region20: #{tpu_custom_call.1} parent=11 // pred_fallthru
          _
        // Predicated region
        $region21: #{tpu_custom_call.1} parent=11 // pred_check
          %p306 = pneg %p112
        $region22: #{tpu_custom_call.1} parent=11 // pred_check_branch
          %308 = sbr.rel (%p306) target = $region24
        $region23: #{tpu_custom_call.1} parent=11 // pred_region
          _
        $region24: #{tpu_custom_call.1} parent=11 // pred_fallthru
          _
        // Predicated region
        $region25: #{tpu_custom_call.1} parent=11 // pred_check
          %p309 = pneg %p133
        $region26: #{tpu_custom_call.1} parent=11 // pred_check_branch
          %311 = sbr.rel (%p309) target = $region28
        $region27: #{tpu_custom_call.1} parent=11 // pred_region
          _
        $region28: #{tpu_custom_call.1} parent=11 // pred_fallthru
          _
        // Predicated region
        $region29: #{tpu_custom_call.1} parent=11 // pred_check
          %p312 = pneg %p154
        $region30: #{tpu_custom_call.1} parent=11 // pred_check_branch
          %314 = sbr.rel (%p312) target = $region32
        $region31: #{tpu_custom_call.1} parent=11 // pred_region
          _
        $region32: #{tpu_custom_call.1} parent=11 // pred_fallthru
          _
        // Predicated region
        $region33: #{tpu_custom_call.1} parent=11 // pred_check
          %p315 = pneg %p175
        $region34: #{tpu_custom_call.1} parent=11 // pred_check_branch
          %317 = sbr.rel (%p315) target = $region36
        $region35: #{tpu_custom_call.1} parent=11 // pred_region
          _
        $region36: #{tpu_custom_call.1} parent=11 // pred_fallthru
          _
        // Predicated region
        $region37: #{tpu_custom_call.1} parent=11 // pred_check
          %p318 = pneg %p196
        $region38: #{tpu_custom_call.1} parent=11 // pred_check_branch
          %320 = sbr.rel (%p318) target = $region40
        $region39: #{tpu_custom_call.1} parent=11 // pred_region
          _
        $region40: #{tpu_custom_call.1} parent=11 // pred_fallthru
          _
        // Predicated region
        $region41: #{tpu_custom_call.1} parent=11 // pred_check
          %p321 = pneg %p217
        $region42: #{tpu_custom_call.1} parent=11 // pred_check_branch
          %323 = sbr.rel (%p321) target = $region44
        $region43: #{tpu_custom_call.1} parent=11 // pred_region
          _
        $region44: #{tpu_custom_call.1} parent=11 // pred_fallthru
          _
        // Predicated region
        $region45: #{tpu_custom_call.1} parent=11 // pred_check
          %p324 = pneg %p238
        $region46: #{tpu_custom_call.1} parent=11 // pred_check_branch
          %326 = sbr.rel (%p324) target = $region48
        $region47: #{tpu_custom_call.1} parent=11 // pred_region
          _
        $region48: #{tpu_custom_call.1} parent=11 // pred_fallthru
          _
        // Predicated region
        $region49: #{tpu_custom_call.1} parent=11 // pred_check
          %p327 = pneg %p259
        $region50: #{tpu_custom_call.1} parent=11 // pred_check_branch
          %329 = sbr.rel (%p327) target = $region52
        $region51: #{tpu_custom_call.1} parent=11 // pred_region
          _
        $region52: #{tpu_custom_call.1} parent=11 // pred_fallthru
          _
      $region12: #{tpu_custom_call.1} parent=5 // pred_fallthru
        _
      %p330 = scmp.lt.s32.totalorder %s23, 2
      // Predicated region
      $region53: #{tpu_custom_call.1} parent=5 // pred_check
        %p331 = pneg %p330
      $region54: #{tpu_custom_call.1} parent=5 // pred_check_branch
        %333 = sbr.rel (%p331) target = $region56
      $region55: #{tpu_custom_call.1} parent=5 // pred_region
        // Predicated region
        $region57: #{tpu_custom_call.1} parent=55 // pred_check
          %p334 = pneg %p43
        $region58: #{tpu_custom_call.1} parent=55 // pred_check_branch
          %336 = sbr.rel (%p334) target = $region60
        $region59: #{tpu_custom_call.1} parent=55 // pred_region
          %s337 = sand.u32 %s33, 1
          %s338 = scalar_lea.sflag [#allocation3], %s337
          %s339 = sand.u32 %s33, 1
          %s340 = smul.addr %s339, 4
          %s341 = scalar_lea.vmem [#allocation2], %s340
          %s343 = ssub.s32 64, 64
          %344 = vsyncadd %s338, %s343
          %s345 = smul.addr %s23, 64
          %s346 = scalar_lea.hbm %s0, %s345
          %s348 = sshll.u32 %s341, 4
          %s349 = int_to_ptr.vmem [resolvable:$true] %s348
          %351 = dma.hbm_to_vmem [thread:$0]  %s346, 64, %s349, %s338
        $region60: #{tpu_custom_call.1} parent=55 // pred_fallthru
          _
      $region56: #{tpu_custom_call.1} parent=5 // pred_fallthru
        _
      %p352 = scmp.le.s32.totalorder 1, %s23
      %p353 = scmp.lt.s32.totalorder %s23, 3
      %p354 = pnand %p352, %p353
      %p355 = pneg %p354
      // Predicated region
      $region61: #{tpu_custom_call.1} parent=5 // pred_check
        _
      $region62: #{tpu_custom_call.1} parent=5 // pred_check_branch
        %357 = sbr.rel (%p354) target = $region64
      $region63: #{tpu_custom_call.1} parent=5 // pred_region
        %s358 = ssub.s32 %s23, 1
        %s359 = sand.u32 %s36, 1
        %s360 = scalar_lea.sflag [#allocation3], %s359
        %s361 = sand.u32 %s36, 1
        %s362 = smul.addr %s361, 4
        %s363 = scalar_lea.vmem [#allocation2], %s362
        // Predicated region
        $region65: #{tpu_custom_call.1} parent=63 // pred_check
          %p364 = pneg %p49
        $region66: #{tpu_custom_call.1} parent=63 // pred_check_branch
          %366 = sbr.rel (%p364) target = $region68
        $region67: #{tpu_custom_call.1} parent=63 // pred_region
          %367 = dma.done %s360, 64
        $region68: #{tpu_custom_call.1} parent=63 // pred_fallthru
          _
        %s368 = sand.u32 %s36, 1
        %s369 = scalar_lea.sflag [#allocation3], %s368
        %s370 = sand.u32 %s36, 1
        %s371 = smul.addr %s370, 4
        %s372 = scalar_lea.vmem [#allocation2], %s371
        %p373 = pneg %p49
        %p374 = pneg %p46
        %p375 = pneg %p70
        %p376 = pneg %p67
        %p377 = pneg %p91
        %p378 = pneg %p88
        %p379 = pneg %p112
        %p380 = pneg %p109
        %p381 = pneg %p133
        %p382 = pneg %p130
        %p383 = pneg %p154
        %p384 = pneg %p151
        %p385 = pneg %p175
        %p386 = pneg %p172
        %p387 = pneg %p196
        %p388 = pneg %p193
        %p389 = pneg %p217
        %p390 = pneg %p214
        %p391 = pneg %p238
        %p392 = pneg %p235
        %p393 = pneg %p259
        %p394 = pneg %p256
        %p395 = pneg %p285
        %p396 = pneg %p282
        %s397 = sand.u32 %s272, 1
        %s398 = scalar_lea.sflag [#allocation4], %s397
        %s399 = sand.u32 %s272, 1
        %s400 = smul.addr %s399, 4
        %s401 = scalar_lea.vmem [#allocation5], %s400
        %v403 = vld [vmem:[%s363] sm:$0xf]
        %v404 = vpack.c.bf16 %v403, %v403
        %v405 = vld [vmem:[%s1] sm:$0xf]
        %v406 = vld [vmem:[%s2] sm:$0xff]
        %v408 = vrot.slane %v404, 1
        %v409 = vrot.slane %v404, 7
        %410 = vrot.lane.b32.xlu0 %v409, 127
        %v411 = vpop.permute.xlu0 %410
        %vm412 = vcmask 1040384
        %v415 = vsel %vm412, %v408, %v411
        %417 = vset.pattern.permute.xlu0 0
        %418 = vperm.xlu0 %417, %v406
        %v419 = vpop.permute.xlu0 %418
        %vm421 = vcmask 31744
        %v423 = vsel %vm421, %v405, 0
        %vm425 = vcmask 1041408
        %v427 = vsel %vm425, %v404, 0
        %429 = vmatprep.subr.bf16.mxu0 0
        %430 = vmatpush1.bf16.msra.mxu0 %v427
        %431 = vmatprep.subr.bf16.mxu0 0
        %432 = vmatpush1.bf16.msra.mxu0 0
        %433 = vmatprep.subr.bf16.mxu0 0
        %434 = vmatpush1.bf16.msra.mxu0 0
        %435 = vmatprep.subr.bf16.mxu0 0
        %436 = vmatpush1.bf16.msra.mxu0 0
        %437 = vmatprep.subr.bf16.mxu0 0
        %438 = vmatpush1.bf16.msra.mxu0 0
        %439 = vmatprep.subr.bf16.mxu0 0
        %440 = vmatpush1.bf16.msra.mxu0 0
        %441 = vmatprep.subr.bf16.mxu0 0
        %442 = vmatpush1.bf16.msra.mxu0 0
        %443 = vmatprep.subr.bf16.mxu0 0
        %444 = vmatpush1.bf16.msra.mxu0 0
        %445 = vmatprep.subr.bf16.mxu0 0
        %446 = vmatpush1.bf16.msra.mxu0 0
        %447 = vmatprep.subr.bf16.mxu0 0
        %448 = vmatpush1.bf16.msra.mxu0 0
        %449 = vmatprep.subr.bf16.mxu0 0
        %450 = vmatpush1.bf16.msra.mxu0 0
        %451 = vmatprep.subr.bf16.mxu0 0
        %452 = vmatpush1.bf16.msra.mxu0 0
        %453 = vmatprep.subr.bf16.mxu0 0
        %454 = vmatpush1.bf16.msra.mxu0 0
        %455 = vmatprep.subr.bf16.mxu0 0
        %456 = vmatpush1.bf16.msra.mxu0 0
        %457 = vmatprep.subr.bf16.mxu0 0
        %458 = vmatpush1.bf16.msra.mxu0 0
        %459 = vmatprep.subr.bf16.mxu0 0
        %460 = vmatpush1.bf16.msra.mxu0 0
        %461 = vmatprep.mubr.bf16.mxu0 0
        %462 = vmatmul.mubr.bf16.gmra.mrb[0].mxu0 %v423
        %v463 = vpop.f32.mrb[0].mxu0
        %v464 = vadd.f32 %v419, %v463
        %v465 = vpop.f32.mrb[0].mxu0
        %v466 = vpop.f32.mrb[0].mxu0
        %v467 = vpop.f32.mrb[0].mxu0
        %468 = vdwg.mxu0
        %v469 = vmax.f32 %v464, 0.0
        %v470 = vsel %vm425, %v415, 0
        %472 = vmatprep.subr.bf16.mxu0 0
        %473 = vmatpush1.bf16.msra.mxu0 %v470
        %474 = vmatprep.subr.bf16.mxu0 0
        %475 = vmatpush1.bf16.msra.mxu0 0
        %476 = vmatprep.subr.bf16.mxu0 0
        %477 = vmatpush1.bf16.msra.mxu0 0
        %478 = vmatprep.subr.bf16.mxu0 0
        %479 = vmatpush1.bf16.msra.mxu0 0
        %480 = vmatprep.subr.bf16.mxu0 0
        %481 = vmatpush1.bf16.msra.mxu0 0
        %482 = vmatprep.subr.bf16.mxu0 0
        %483 = vmatpush1.bf16.msra.mxu0 0
        %484 = vmatprep.subr.bf16.mxu0 0
        %485 = vmatpush1.bf16.msra.mxu0 0
        %486 = vmatprep.subr.bf16.mxu0 0
        %487 = vmatpush1.bf16.msra.mxu0 0
        %488 = vmatprep.subr.bf16.mxu0 0
        %489 = vmatpush1.bf16.msra.mxu0 0
        %490 = vmatprep.subr.bf16.mxu0 0
        %491 = vmatpush1.bf16.msra.mxu0 0
        %492 = vmatprep.subr.bf16.mxu0 0
        %493 = vmatpush1.bf16.msra.mxu0 0
        %494 = vmatprep.subr.bf16.mxu0 0
        %495 = vmatpush1.bf16.msra.mxu0 0
        %496 = vmatprep.subr.bf16.mxu0 0
        %497 = vmatpush1.bf16.msra.mxu0 0
        %498 = vmatprep.subr.bf16.mxu0 0
        %499 = vmatpush1.bf16.msra.mxu0 0
        %500 = vmatprep.subr.bf16.mxu0 0
        %501 = vmatpush1.bf16.msra.mxu0 0
        %502 = vmatprep.subr.bf16.mxu0 0
        %503 = vmatpush1.bf16.msra.mxu0 0
        %504 = vmatprep.mubr.bf16.mxu0 0
        %505 = vmatmul.mubr.bf16.gmra.mrb[0].mxu0 %v423
        %v506 = vpop.f32.mrb[0].mxu0
        %v507 = vadd.f32 %v419, %v506
        %v508 = vpop.f32.mrb[0].mxu0
        %v509 = vpop.f32.mrb[0].mxu0
        %v510 = vpop.f32.mrb[0].mxu0
        %511 = vdwg.mxu0
        %v512 = vmax.f32 %v507, 0.0
        %v513 = vld [vmem:[%s3] sm:$0xf]
        %v514 = vld [vmem:[%s3 + $0x4] sm:$0xf]
        %v515 = vld [vmem:[%s3 + $0x8] sm:$0xf]
        %v516 = vld [vmem:[%s3 + $0xc] sm:$0xf]
        %v517 = vld [vmem:[%s4] sm:$0xff]
        %v518 = vpack.c.bf16 %v469, %v469
        %vm519 = vcmask 64512
        %v521 = vsel %vm519, %v513, 0
        %vm523 = vcmask 1043456
        %v525 = vsel %vm523, %v518, 0
        %527 = vmatprep.subr.bf16.mxu0 0
        %528 = vmatpush1.bf16.msra.mxu0 %v525
        %529 = vmatprep.subr.bf16.mxu0 0
        %530 = vmatpush1.bf16.msra.mxu0 0
        %531 = vmatprep.subr.bf16.mxu0 0
        %532 = vmatpush1.bf16.msra.mxu0 0
        %533 = vmatprep.subr.bf16.mxu0 0
        %534 = vmatpush1.bf16.msra.mxu0 0
        %535 = vmatprep.subr.bf16.mxu0 0
        %536 = vmatpush1.bf16.msra.mxu0 0
        %537 = vmatprep.subr.bf16.mxu0 0
        %538 = vmatpush1.bf16.msra.mxu0 0
        %539 = vmatprep.subr.bf16.mxu0 0
        %540 = vmatpush1.bf16.msra.mxu0 0
        %541 = vmatprep.subr.bf16.mxu0 0
        %542 = vmatpush1.bf16.msra.mxu0 0
        %543 = vmatprep.subr.bf16.mxu0 0
        %544 = vmatpush1.bf16.msra.mxu0 0
        %545 = vmatprep.subr.bf16.mxu0 0
        %546 = vmatpush1.bf16.msra.mxu0 0
        %547 = vmatprep.subr.bf16.mxu0 0
        %548 = vmatpush1.bf16.msra.mxu0 0
        %549 = vmatprep.subr.bf16.mxu0 0
        %550 = vmatpush1.bf16.msra.mxu0 0
        %551 = vmatprep.subr.bf16.mxu0 0
        %552 = vmatpush1.bf16.msra.mxu0 0
        %553 = vmatprep.subr.bf16.mxu0 0
        %554 = vmatpush1.bf16.msra.mxu0 0
        %555 = vmatprep.subr.bf16.mxu0 0
        %556 = vmatpush1.bf16.msra.mxu0 0
        %557 = vmatprep.subr.bf16.mxu0 0
        %558 = vmatpush1.bf16.msra.mxu0 0
        %559 = vmatprep.mubr.bf16.mxu0 0
        %560 = vmatmul.mubr.bf16.gmra.mrb[0].mxu0 %v521
        %v561 = vpop.f32.mrb[0].mxu0
        %v562 = vadd.f32 0.0, %v561
        %v563 = vpop.f32.mrb[0].mxu0
        %v564 = vpop.f32.mrb[0].mxu0
        %v565 = vpop.f32.mrb[0].mxu0
        %566 = vdwg.mxu0
        %568 = vset.pattern.permute.xlu0 0
        %569 = vperm.xlu0 %568, %v517
        %v570 = vpop.permute.xlu0 %569
        %v572 = vadd.f32 %v570, %v562
        %v573 = vpack.c.bf16 %v512, %v512
        %v575 = vsel %vm519, %v514, 0
        %v578 = vsel %vm523, %v573, 0
        %580 = vmatprep.subr.bf16.mxu0 0
        %581 = vmatpush1.bf16.msra.mxu0 %v578
        %582 = vmatprep.subr.bf16.mxu0 0
        %583 = vmatpush1.bf16.msra.mxu0 0
        %584 = vmatprep.subr.bf16.mxu0 0
        %585 = vmatpush1.bf16.msra.mxu0 0
        %586 = vmatprep.subr.bf16.mxu0 0
        %587 = vmatpush1.bf16.msra.mxu0 0
        %588 = vmatprep.subr.bf16.mxu0 0
        %589 = vmatpush1.bf16.msra.mxu0 0
        %590 = vmatprep.subr.bf16.mxu0 0
        %591 = vmatpush1.bf16.msra.mxu0 0
        %592 = vmatprep.subr.bf16.mxu0 0
        %593 = vmatpush1.bf16.msra.mxu0 0
        %594 = vmatprep.subr.bf16.mxu0 0
        %595 = vmatpush1.bf16.msra.mxu0 0
        %596 = vmatprep.subr.bf16.mxu0 0
        %597 = vmatpush1.bf16.msra.mxu0 0
        %598 = vmatprep.subr.bf16.mxu0 0
        %599 = vmatpush1.bf16.msra.mxu0 0
        %600 = vmatprep.subr.bf16.mxu0 0
        %601 = vmatpush1.bf16.msra.mxu0 0
        %602 = vmatprep.subr.bf16.mxu0 0
        %603 = vmatpush1.bf16.msra.mxu0 0
        %604 = vmatprep.subr.bf16.mxu0 0
        %605 = vmatpush1.bf16.msra.mxu0 0
        %606 = vmatprep.subr.bf16.mxu0 0
        %607 = vmatpush1.bf16.msra.mxu0 0
        %608 = vmatprep.subr.bf16.mxu0 0
        %609 = vmatpush1.bf16.msra.mxu0 0
        %610 = vmatprep.subr.bf16.mxu0 0
        %611 = vmatpush1.bf16.msra.mxu0 0
        %612 = vmatprep.mubr.bf16.mxu0 0
        %613 = vmatmul.mubr.bf16.gmra.mrb[0].mxu0 %v575
        %v614 = vpop.f32.mrb[0].mxu0
        %v615 = vadd.f32 0.0, %v614
        %v616 = vpop.f32.mrb[0].mxu0
        %v617 = vpop.f32.mrb[0].mxu0
        %v618 = vpop.f32.mrb[0].mxu0
        %619 = vdwg.mxu0
        %v620 = vadd.f32 %v572, %v615
        %622 = vrot.lane.b32.xlu0 %v518, 127
        %v623 = vpop.permute.xlu0 %622
        %v625 = vsel %vm519, %v515, 0
        %v628 = vsel %vm523, %v623, 0
        %630 = vmatprep.subr.bf16.mxu0 0
        %631 = vmatpush1.bf16.msra.mxu0 %v628
        %632 = vmatprep.subr.bf16.mxu0 0
        %633 = vmatpush1.bf16.msra.mxu0 0
        %634 = vmatprep.subr.bf16.mxu0 0
        %635 = vmatpush1.bf16.msra.mxu0 0
        %636 = vmatprep.subr.bf16.mxu0 0
        %637 = vmatpush1.bf16.msra.mxu0 0
        %638 = vmatprep.subr.bf16.mxu0 0
        %639 = vmatpush1.bf16.msra.mxu0 0
        %640 = vmatprep.subr.bf16.mxu0 0
        %641 = vmatpush1.bf16.msra.mxu0 0
        %642 = vmatprep.subr.bf16.mxu0 0
        %643 = vmatpush1.bf16.msra.mxu0 0
        %644 = vmatprep.subr.bf16.mxu0 0
        %645 = vmatpush1.bf16.msra.mxu0 0
        %646 = vmatprep.subr.bf16.mxu0 0
        %647 = vmatpush1.bf16.msra.mxu0 0
        %648 = vmatprep.subr.bf16.mxu0 0
        %649 = vmatpush1.bf16.msra.mxu0 0
        %650 = vmatprep.subr.bf16.mxu0 0
        %651 = vmatpush1.bf16.msra.mxu0 0
        %652 = vmatprep.subr.bf16.mxu0 0
        %653 = vmatpush1.bf16.msra.mxu0 0
        %654 = vmatprep.subr.bf16.mxu0 0
        %655 = vmatpush1.bf16.msra.mxu0 0
        %656 = vmatprep.subr.bf16.mxu0 0
        %657 = vmatpush1.bf16.msra.mxu0 0
        %658 = vmatprep.subr.bf16.mxu0 0
        %659 = vmatpush1.bf16.msra.mxu0 0
        %660 = vmatprep.subr.bf16.mxu0 0
        %661 = vmatpush1.bf16.msra.mxu0 0
        %662 = vmatprep.mubr.bf16.mxu0 0
        %663 = vmatmul.mubr.bf16.gmra.mrb[0].mxu0 %v625
        %v664 = vpop.f32.mrb[0].mxu0
        %v665 = vadd.f32 0.0, %v664
        %v666 = vpop.f32.mrb[0].mxu0
        %v667 = vpop.f32.mrb[0].mxu0
        %v668 = vpop.f32.mrb[0].mxu0
        %669 = vdwg.mxu0
        %v670 = vadd.f32 %v620, %v665
        %672 = vrot.lane.b32.xlu0 %v573, 127
        %v673 = vpop.permute.xlu0 %672
        %v675 = vsel %vm519, %v516, 0
        %v678 = vsel %vm523, %v673, 0
        %680 = vmatprep.subr.bf16.mxu0 0
        %681 = vmatpush1.bf16.msra.mxu0 %v678
        %682 = vmatprep.subr.bf16.mxu0 0
        %683 = vmatpush1.bf16.msra.mxu0 0
        %684 = vmatprep.subr.bf16.mxu0 0
        %685 = vmatpush1.bf16.msra.mxu0 0
        %686 = vmatprep.subr.bf16.mxu0 0
        %687 = vmatpush1.bf16.msra.mxu0 0
        %688 = vmatprep.subr.bf16.mxu0 0
        %689 = vmatpush1.bf16.msra.mxu0 0
        %690 = vmatprep.subr.bf16.mxu0 0
        %691 = vmatpush1.bf16.msra.mxu0 0
        %692 = vmatprep.subr.bf16.mxu0 0
        %693 = vmatpush1.bf16.msra.mxu0 0
        %694 = vmatprep.subr.bf16.mxu0 0
        %695 = vmatpush1.bf16.msra.mxu0 0
        %696 = vmatprep.subr.bf16.mxu0 0
        %697 = vmatpush1.bf16.msra.mxu0 0
        %698 = vmatprep.subr.bf16.mxu0 0
        %699 = vmatpush1.bf16.msra.mxu0 0
        %700 = vmatprep.subr.bf16.mxu0 0
        %701 = vmatpush1.bf16.msra.mxu0 0
        %702 = vmatprep.subr.bf16.mxu0 0
        %703 = vmatpush1.bf16.msra.mxu0 0
        %704 = vmatprep.subr.bf16.mxu0 0
        %705 = vmatpush1.bf16.msra.mxu0 0
        %706 = vmatprep.subr.bf16.mxu0 0
        %707 = vmatpush1.bf16.msra.mxu0 0
        %708 = vmatprep.subr.bf16.mxu0 0
        %709 = vmatpush1.bf16.msra.mxu0 0
        %710 = vmatprep.subr.bf16.mxu0 0
        %711 = vmatpush1.bf16.msra.mxu0 0
        %712 = vmatprep.mubr.bf16.mxu0 0
        %713 = vmatmul.mubr.bf16.gmra.mrb[0].mxu0 %v675
        %v714 = vpop.f32.mrb[0].mxu0
        %v715 = vadd.f32 0.0, %v714
        %v716 = vpop.f32.mrb[0].mxu0
        %v717 = vpop.f32.mrb[0].mxu0
        %v718 = vpop.f32.mrb[0].mxu0
        %719 = vdwg.mxu0
        %v720 = vadd.f32 %v670, %v715
        %v721 = vmax.f32 %v720, 0.0
        %vm722 = vcmask 113664
        %v723 = vsel %vm722, %v721, 0.0
        %v724 = vpack.c.bf16 %v723, %v723
        %726 = vrot.lane.b32.xlu0 %v724, 2
        %v727 = vpop.permute.xlu0 %726
        %vm728 = vcmask 15360
        %v731 = vsel %vm728, 0, %v727
        %v732 = vld [vmem:[%s5] sm:$0xf]
        %v733 = vld [vmem:[%s5 + $0x4] sm:$0xf]
        %v734 = vld [vmem:[%s5 + $0x8] sm:$0xf]
        %v735 = vld [vmem:[%s6] sm:$0xff]
        %v737 = vsel %vm519, %v732, 0
        %v739 = vsel %vm523, %v731, 0
        %741 = vmatprep.subr.bf16.mxu0 0
        %742 = vmatpush1.bf16.msra.mxu0 %v739
        %743 = vmatprep.subr.bf16.mxu0 0
        %744 = vmatpush1.bf16.msra.mxu0 0
        %745 = vmatprep.subr.bf16.mxu0 0
        %746 = vmatpush1.bf16.msra.mxu0 0
        %747 = vmatprep.subr.bf16.mxu0 0
        %748 = vmatpush1.bf16.msra.mxu0 0
        %749 = vmatprep.subr.bf16.mxu0 0
        %750 = vmatpush1.bf16.msra.mxu0 0
        %751 = vmatprep.subr.bf16.mxu0 0
        %752 = vmatpush1.bf16.msra.mxu0 0
        %753 = vmatprep.subr.bf16.mxu0 0
        %754 = vmatpush1.bf16.msra.mxu0 0
        %755 = vmatprep.subr.bf16.mxu0 0
        %756 = vmatpush1.bf16.msra.mxu0 0
        %757 = vmatprep.subr.bf16.mxu0 0
        %758 = vmatpush1.bf16.msra.mxu0 0
        %759 = vmatprep.subr.bf16.mxu0 0
        %760 = vmatpush1.bf16.msra.mxu0 0
        %761 = vmatprep.subr.bf16.mxu0 0
        %762 = vmatpush1.bf16.msra.mxu0 0
        %763 = vmatprep.subr.bf16.mxu0 0
        %764 = vmatpush1.bf16.msra.mxu0 0
        %765 = vmatprep.subr.bf16.mxu0 0
        %766 = vmatpush1.bf16.msra.mxu0 0
        %767 = vmatprep.subr.bf16.mxu0 0
        %768 = vmatpush1.bf16.msra.mxu0 0
        %769 = vmatprep.subr.bf16.mxu0 0
        %770 = vmatpush1.bf16.msra.mxu0 0
        %771 = vmatprep.subr.bf16.mxu0 0
        %772 = vmatpush1.bf16.msra.mxu0 0
        %773 = vmatprep.mubr.bf16.mxu0 0
        %774 = vmatmul.mubr.bf16.gmra.mrb[0].mxu0 %v737
        %v775 = vpop.f32.mrb[0].mxu0
        %v776 = vadd.f32 0.0, %v775
        %v777 = vpop.f32.mrb[0].mxu0
        %v778 = vpop.f32.mrb[0].mxu0
        %v779 = vpop.f32.mrb[0].mxu0
        %780 = vdwg.mxu0
        %782 = vset.pattern.permute.xlu0 0
        %783 = vperm.xlu0 %782, %v735
        %v784 = vpop.permute.xlu0 %783
        %v786 = vadd.f32 %v784, %v776
        %788 = vrot.lane.b32.xlu0 %v731, 127
        %v789 = vpop.permute.xlu0 %788
        %790 = vrot.lane.b32.xlu0 %v727, 127
        %v791 = vpop.permute.xlu0 %790
        %vm792 = vcmask 1039360
        %v793 = vsel %vm792, %v789, %v791
        %v795 = vsel %vm519, %v733, 0
        %v798 = vsel %vm523, %v793, 0
        %800 = vmatprep.subr.bf16.mxu0 0
        %801 = vmatpush1.bf16.msra.mxu0 %v798
        %802 = vmatprep.subr.bf16.mxu0 0
        %803 = vmatpush1.bf16.msra.mxu0 0
        %804 = vmatprep.subr.bf16.mxu0 0
        %805 = vmatpush1.bf16.msra.mxu0 0
        %806 = vmatprep.subr.bf16.mxu0 0
        %807 = vmatpush1.bf16.msra.mxu0 0
        %808 = vmatprep.subr.bf16.mxu0 0
        %809 = vmatpush1.bf16.msra.mxu0 0
        %810 = vmatprep.subr.bf16.mxu0 0
        %811 = vmatpush1.bf16.msra.mxu0 0
        %812 = vmatprep.subr.bf16.mxu0 0
        %813 = vmatpush1.bf16.msra.mxu0 0
        %814 = vmatprep.subr.bf16.mxu0 0
        %815 = vmatpush1.bf16.msra.mxu0 0
        %816 = vmatprep.subr.bf16.mxu0 0
        %817 = vmatpush1.bf16.msra.mxu0 0
        %818 = vmatprep.subr.bf16.mxu0 0
        %819 = vmatpush1.bf16.msra.mxu0 0
        %820 = vmatprep.subr.bf16.mxu0 0
        %821 = vmatpush1.bf16.msra.mxu0 0
        %822 = vmatprep.subr.bf16.mxu0 0
        %823 = vmatpush1.bf16.msra.mxu0 0
        %824 = vmatprep.subr.bf16.mxu0 0
        %825 = vmatpush1.bf16.msra.mxu0 0
        %826 = vmatprep.subr.bf16.mxu0 0
        %827 = vmatpush1.bf16.msra.mxu0 0
        %828 = vmatprep.subr.bf16.mxu0 0
        %829 = vmatpush1.bf16.msra.mxu0 0
        %830 = vmatprep.subr.bf16.mxu0 0
        %831 = vmatpush1.bf16.msra.mxu0 0
        %832 = vmatprep.mubr.bf16.mxu0 0
        %833 = vmatmul.mubr.bf16.gmra.mrb[0].mxu0 %v795
        %v834 = vpop.f32.mrb[0].mxu0
        %v835 = vadd.f32 0.0, %v834
        %v836 = vpop.f32.mrb[0].mxu0
        %v837 = vpop.f32.mrb[0].mxu0
        %v838 = vpop.f32.mrb[0].mxu0
        %839 = vdwg.mxu0
        %v840 = vadd.f32 %v786, %v835
        %841 = vrot.lane.b32.xlu0 %v731, 126
        %v842 = vpop.permute.xlu0 %841
        %843 = vrot.lane.b32.xlu0 %v727, 126
        %v844 = vpop.permute.xlu0 %843
        %vm845 = vcmask 1031168
        %v846 = vsel %vm845, %v842, %v844
        %v848 = vsel %vm519, %v734, 0
        %v851 = vsel %vm523, %v846, 0
        %853 = vmatprep.subr.bf16.mxu0 0
        %854 = vmatpush1.bf16.msra.mxu0 %v851
        %855 = vmatprep.subr.bf16.mxu0 0
        %856 = vmatpush1.bf16.msra.mxu0 0
        %857 = vmatprep.subr.bf16.mxu0 0
        %858 = vmatpush1.bf16.msra.mxu0 0
        %859 = vmatprep.subr.bf16.mxu0 0
        %860 = vmatpush1.bf16.msra.mxu0 0
        %861 = vmatprep.subr.bf16.mxu0 0
        %862 = vmatpush1.bf16.msra.mxu0 0
        %863 = vmatprep.subr.bf16.mxu0 0
        %864 = vmatpush1.bf16.msra.mxu0 0
        %865 = vmatprep.subr.bf16.mxu0 0
        %866 = vmatpush1.bf16.msra.mxu0 0
        %867 = vmatprep.subr.bf16.mxu0 0
        %868 = vmatpush1.bf16.msra.mxu0 0
        %869 = vmatprep.subr.bf16.mxu0 0
        %870 = vmatpush1.bf16.msra.mxu0 0
        %871 = vmatprep.subr.bf16.mxu0 0
        %872 = vmatpush1.bf16.msra.mxu0 0
        %873 = vmatprep.subr.bf16.mxu0 0
        %874 = vmatpush1.bf16.msra.mxu0 0
        %875 = vmatprep.subr.bf16.mxu0 0
        %876 = vmatpush1.bf16.msra.mxu0 0
        %877 = vmatprep.subr.bf16.mxu0 0
        %878 = vmatpush1.bf16.msra.mxu0 0
        %879 = vmatprep.subr.bf16.mxu0 0
        %880 = vmatpush1.bf16.msra.mxu0 0
        %881 = vmatprep.subr.bf16.mxu0 0
        %882 = vmatpush1.bf16.msra.mxu0 0
        %883 = vmatprep.subr.bf16.mxu0 0
        %884 = vmatpush1.bf16.msra.mxu0 0
        %885 = vmatprep.mubr.bf16.mxu0 0
        %886 = vmatmul.mubr.bf16.gmra.mrb[0].mxu0 %v848
        %v887 = vpop.f32.mrb[0].mxu0
        %v888 = vadd.f32 0.0, %v887
        %v889 = vpop.f32.mrb[0].mxu0
        %v890 = vpop.f32.mrb[0].mxu0
        %v891 = vpop.f32.mrb[0].mxu0
        %892 = vdwg.mxu0
        %v893 = vadd.f32 %v840, %v888
        %v894 = vmax.f32 %v893, 0.0
        %v895 = vpack.c.bf16 %v894, %v894
        %897 = vrot.lane.b32.xlu0 %v895, 2
        %v898 = vpop.permute.xlu0 %897
        %v900 = vsel %vm728, 0, %v898
        %v901 = vld [vmem:[%s7] sm:$0xf]
        %v902 = vld [vmem:[%s7 + $0x4] sm:$0xf]
        %v903 = vld [vmem:[%s7 + $0x8] sm:$0xf]
        %v904 = vld [vmem:[%s8] sm:$0xff]
        %v906 = vsel %vm519, %v901, 0
        %v908 = vsel %vm523, %v900, 0
        %910 = vmatprep.subr.bf16.mxu0 0
        %911 = vmatpush1.bf16.msra.mxu0 %v908
        %912 = vmatprep.subr.bf16.mxu0 0
        %913 = vmatpush1.bf16.msra.mxu0 0
        %914 = vmatprep.subr.bf16.mxu0 0
        %915 = vmatpush1.bf16.msra.mxu0 0
        %916 = vmatprep.subr.bf16.mxu0 0
        %917 = vmatpush1.bf16.msra.mxu0 0
        %918 = vmatprep.subr.bf16.mxu0 0
        %919 = vmatpush1.bf16.msra.mxu0 0
        %920 = vmatprep.subr.bf16.mxu0 0
        %921 = vmatpush1.bf16.msra.mxu0 0
        %922 = vmatprep.subr.bf16.mxu0 0
        %923 = vmatpush1.bf16.msra.mxu0 0
        %924 = vmatprep.subr.bf16.mxu0 0
        %925 = vmatpush1.bf16.msra.mxu0 0
        %926 = vmatprep.subr.bf16.mxu0 0
        %927 = vmatpush1.bf16.msra.mxu0 0
        %928 = vmatprep.subr.bf16.mxu0 0
        %929 = vmatpush1.bf16.msra.mxu0 0
        %930 = vmatprep.subr.bf16.mxu0 0
        %931 = vmatpush1.bf16.msra.mxu0 0
        %932 = vmatprep.subr.bf16.mxu0 0
        %933 = vmatpush1.bf16.msra.mxu0 0
        %934 = vmatprep.subr.bf16.mxu0 0
        %935 = vmatpush1.bf16.msra.mxu0 0
        %936 = vmatprep.subr.bf16.mxu0 0
        %937 = vmatpush1.bf16.msra.mxu0 0
        %938 = vmatprep.subr.bf16.mxu0 0
        %939 = vmatpush1.bf16.msra.mxu0 0
        %940 = vmatprep.subr.bf16.mxu0 0
        %941 = vmatpush1.bf16.msra.mxu0 0
        %942 = vmatprep.mubr.bf16.mxu0 0
        %943 = vmatmul.mubr.bf16.gmra.mrb[0].mxu0 %v906
        %v944 = vpop.f32.mrb[0].mxu0
        %v945 = vadd.f32 0.0, %v944
        %v946 = vpop.f32.mrb[0].mxu0
        %v947 = vpop.f32.mrb[0].mxu0
        %v948 = vpop.f32.mrb[0].mxu0
        %949 = vdwg.mxu0
        %951 = vset.pattern.permute.xlu0 0
        %952 = vperm.xlu0 %951, %v904
        %v953 = vpop.permute.xlu0 %952
        %v955 = vadd.f32 %v953, %v945
        %957 = vrot.lane.b32.xlu0 %v900, 127
        %v958 = vpop.permute.xlu0 %957
        %959 = vrot.lane.b32.xlu0 %v898, 127
        %v960 = vpop.permute.xlu0 %959
        %v961 = vsel %vm792, %v958, %v960
        %v963 = vsel %vm519, %v902, 0
        %v966 = vsel %vm523, %v961, 0
        %968 = vmatprep.subr.bf16.mxu0 0
        %969 = vmatpush1.bf16.msra.mxu0 %v966
        %970 = vmatprep.subr.bf16.mxu0 0
        %971 = vmatpush1.bf16.msra.mxu0 0
        %972 = vmatprep.subr.bf16.mxu0 0
        %973 = vmatpush1.bf16.msra.mxu0 0
        %974 = vmatprep.subr.bf16.mxu0 0
        %975 = vmatpush1.bf16.msra.mxu0 0
        %976 = vmatprep.subr.bf16.mxu0 0
        %977 = vmatpush1.bf16.msra.mxu0 0
        %978 = vmatprep.subr.bf16.mxu0 0
        %979 = vmatpush1.bf16.msra.mxu0 0
        %980 = vmatprep.subr.bf16.mxu0 0
        %981 = vmatpush1.bf16.msra.mxu0 0
        %982 = vmatprep.subr.bf16.mxu0 0
        %983 = vmatpush1.bf16.msra.mxu0 0
        %984 = vmatprep.subr.bf16.mxu0 0
        %985 = vmatpush1.bf16.msra.mxu0 0
        %986 = vmatprep.subr.bf16.mxu0 0
        %987 = vmatpush1.bf16.msra.mxu0 0
        %988 = vmatprep.subr.bf16.mxu0 0
        %989 = vmatpush1.bf16.msra.mxu0 0
        %990 = vmatprep.subr.bf16.mxu0 0
        %991 = vmatpush1.bf16.msra.mxu0 0
        %992 = vmatprep.subr.bf16.mxu0 0
        %993 = vmatpush1.bf16.msra.mxu0 0
        %994 = vmatprep.subr.bf16.mxu0 0
        %995 = vmatpush1.bf16.msra.mxu0 0
        %996 = vmatprep.subr.bf16.mxu0 0
        %997 = vmatpush1.bf16.msra.mxu0 0
        %998 = vmatprep.subr.bf16.mxu0 0
        %999 = vmatpush1.bf16.msra.mxu0 0
        %1000 = vmatprep.mubr.bf16.mxu0 0
        %1001 = vmatmul.mubr.bf16.gmra.mrb[0].mxu0 %v963
        %v1002 = vpop.f32.mrb[0].mxu0
        %v1003 = vadd.f32 0.0, %v1002
        %v1004 = vpop.f32.mrb[0].mxu0
        %v1005 = vpop.f32.mrb[0].mxu0
        %v1006 = vpop.f32.mrb[0].mxu0
        %1007 = vdwg.mxu0
        %v1008 = vadd.f32 %v955, %v1003
        %1009 = vrot.lane.b32.xlu0 %v900, 126
        %v1010 = vpop.permute.xlu0 %1009
        %1011 = vrot.lane.b32.xlu0 %v898, 126
        %v1012 = vpop.permute.xlu0 %1011
        %v1013 = vsel %vm845, %v1010, %v1012
        %v1015 = vsel %vm519, %v903, 0
        %v1018 = vsel %vm523, %v1013, 0
        %1020 = vmatprep.subr.bf16.mxu0 0
        %1021 = vmatpush1.bf16.msra.mxu0 %v1018
        %1022 = vmatprep.subr.bf16.mxu0 0
        %1023 = vmatpush1.bf16.msra.mxu0 0
        %1024 = vmatprep.subr.bf16.mxu0 0
        %1025 = vmatpush1.bf16.msra.mxu0 0
        %1026 = vmatprep.subr.bf16.mxu0 0
        %1027 = vmatpush1.bf16.msra.mxu0 0
        %1028 = vmatprep.subr.bf16.mxu0 0
        %1029 = vmatpush1.bf16.msra.mxu0 0
        %1030 = vmatprep.subr.bf16.mxu0 0
        %1031 = vmatpush1.bf16.msra.mxu0 0
        %1032 = vmatprep.subr.bf16.mxu0 0
        %1033 = vmatpush1.bf16.msra.mxu0 0
        %1034 = vmatprep.subr.bf16.mxu0 0
        %1035 = vmatpush1.bf16.msra.mxu0 0
        %1036 = vmatprep.subr.bf16.mxu0 0
        %1037 = vmatpush1.bf16.msra.mxu0 0
        %1038 = vmatprep.subr.bf16.mxu0 0
        %1039 = vmatpush1.bf16.msra.mxu0 0
        %1040 = vmatprep.subr.bf16.mxu0 0
        %1041 = vmatpush1.bf16.msra.mxu0 0
        %1042 = vmatprep.subr.bf16.mxu0 0
        %1043 = vmatpush1.bf16.msra.mxu0 0
        %1044 = vmatprep.subr.bf16.mxu0 0
        %1045 = vmatpush1.bf16.msra.mxu0 0
        %1046 = vmatprep.subr.bf16.mxu0 0
        %1047 = vmatpush1.bf16.msra.mxu0 0
        %1048 = vmatprep.subr.bf16.mxu0 0
        %1049 = vmatpush1.bf16.msra.mxu0 0
        %1050 = vmatprep.subr.bf16.mxu0 0
        %1051 = vmatpush1.bf16.msra.mxu0 0
        %1052 = vmatprep.mubr.bf16.mxu0 0
        %1053 = vmatmul.mubr.bf16.gmra.mrb[0].mxu0 %v1015
        %v1054 = vpop.f32.mrb[0].mxu0
        %v1055 = vadd.f32 0.0, %v1054
        %v1056 = vpop.f32.mrb[0].mxu0
        %v1057 = vpop.f32.mrb[0].mxu0
        %v1058 = vpop.f32.mrb[0].mxu0
        %1059 = vdwg.mxu0
        %v1060 = vadd.f32 %v1008, %v1055
        %v1061 = vmax.f32 %v1060, 0.0
        %v1062 = vld [vmem:[%s9] sm:$0x3]
        %v1063 = vpack.c.bf16 %v1061, %v1061
        %v1064 = vld [vmem:[%s10] sm:$0xf]
        %1066 = vset.pattern.permute.xlu0 0
        %1067 = vperm.xlu0 %1066, %v1064
        %v1068 = vpop.permute.xlu0 %1067
        %v1071 = vsel %vm519, %v1062, 0
        %v1074 = vsel %vm523, %v1063, 0
        %1076 = vmatprep.subr.bf16.mxu0 0
        %1077 = vmatpush1.bf16.msra.mxu0 %v1074
        %1078 = vmatprep.subr.bf16.mxu0 0
        %1079 = vmatpush1.bf16.msra.mxu0 0
        %1080 = vmatprep.subr.bf16.mxu0 0
        %1081 = vmatpush1.bf16.msra.mxu0 0
        %1082 = vmatprep.subr.bf16.mxu0 0
        %1083 = vmatpush1.bf16.msra.mxu0 0
        %1084 = vmatprep.subr.bf16.mxu0 0
        %1085 = vmatpush1.bf16.msra.mxu0 0
        %1086 = vmatprep.subr.bf16.mxu0 0
        %1087 = vmatpush1.bf16.msra.mxu0 0
        %1088 = vmatprep.subr.bf16.mxu0 0
        %1089 = vmatpush1.bf16.msra.mxu0 0
        %1090 = vmatprep.subr.bf16.mxu0 0
        %1091 = vmatpush1.bf16.msra.mxu0 0
        %1092 = vmatprep.subr.bf16.mxu0 0
        %1093 = vmatpush1.bf16.msra.mxu0 0
        %1094 = vmatprep.subr.bf16.mxu0 0
        %1095 = vmatpush1.bf16.msra.mxu0 0
        %1096 = vmatprep.subr.bf16.mxu0 0
        %1097 = vmatpush1.bf16.msra.mxu0 0
        %1098 = vmatprep.subr.bf16.mxu0 0
        %1099 = vmatpush1.bf16.msra.mxu0 0
        %1100 = vmatprep.subr.bf16.mxu0 0
        %1101 = vmatpush1.bf16.msra.mxu0 0
        %1102 = vmatprep.subr.bf16.mxu0 0
        %1103 = vmatpush1.bf16.msra.mxu0 0
        %1104 = vmatprep.subr.bf16.mxu0 0
        %1105 = vmatpush1.bf16.msra.mxu0 0
        %1106 = vmatprep.subr.bf16.mxu0 0
        %1107 = vmatpush1.bf16.msra.mxu0 0
        %1108 = vmatprep.mubr.bf16.mxu0 0
        %1109 = vmatmul.mubr.bf16.gmra.mrb[0].mxu0 %v1071
        %v1110 = vpop.f32.mrb[0].mxu0
        %v1111 = vadd.f32 %v1068, %v1110
        %v1112 = vpop.f32.mrb[0].mxu0
        %v1113 = vpop.f32.mrb[0].mxu0
        %v1114 = vpop.f32.mrb[0].mxu0
        %1115 = vdwg.mxu0
        %1116 = vst [vmem:[%s401] sm:$0xf] %v1111
        %s1117 = sand.u32 %s272, 1
        %s1118 = scalar_lea.sflag [#allocation4], %s1117
        %s1119 = sand.u32 %s272, 1
        %s1120 = smul.addr %s1119, 4
        %s1121 = scalar_lea.vmem [#allocation5], %s1120
        // Predicated region
        $region69: #{tpu_custom_call.1} parent=63 // pred_check
          %p1122 = pneg %p282
        $region70: #{tpu_custom_call.1} parent=63 // pred_check_branch
          %1124 = sbr.rel (%p1122) target = $region72
        $region71: #{tpu_custom_call.1} parent=63 // pred_region
          %s1126 = ssub.s32 64, 64
          %1127 = vsyncadd %s1118, %s1126
          %s1128 = smul.addr %s28, 64
          %s1129 = scalar_lea.hbm %s11, %s1128
          %s1131 = sshll.u32 %s1121, 4
          %s1132 = int_to_ptr.vmem [resolvable:$true] %s1131
          %1134 = dma.vmem_to_hbm [thread:$0]  %s1132, 64, %s1129, %s1118
        $region72: #{tpu_custom_call.1} parent=63 // pred_fallthru
          _
      $region64: #{tpu_custom_call.1} parent=5 // pred_fallthru
        _
      %p1135 = scmp.le.s32.totalorder 2, %s23
      // Predicated region
      $region73: #{tpu_custom_call.1} parent=5 // pred_check
        %p1136 = pneg %p1135
      $region74: #{tpu_custom_call.1} parent=5 // pred_check_branch
        %1138 = sbr.rel (%p1136) target = $region76
      $region75: #{tpu_custom_call.1} parent=5 // pred_region
        %s1139 = ssub.s32 %s23, 2
        // Predicated region
        $region77: #{tpu_custom_call.1} parent=75 // pred_check
          %p1140 = pneg %p288
        $region78: #{tpu_custom_call.1} parent=75 // pred_check_branch
          %1142 = sbr.rel (%p1140) target = $region80
        $region79: #{tpu_custom_call.1} parent=75 // pred_region
          %s1143 = sand.u32 %s273, 1
          %s1144 = scalar_lea.sflag [#allocation4], %s1143
          %s1145 = sand.u32 %s273, 1
          %s1146 = smul.addr %s1145, 4
          %s1147 = scalar_lea.vmem [#allocation5], %s1146
          %1148 = dma.done %s1144, 64
        $region80: #{tpu_custom_call.1} parent=75 // pred_fallthru
          _
      $region76: #{tpu_custom_call.1} parent=5 // pred_fallthru
        _
    $region6: #{tpu_custom_call.1} parent=1 // loop_footer
      %s27 = sadd.s32 1, %s23
    $region7: #{tpu_custom_call.1} parent=1 // loop_footer_branch
      %22 = sbr.rel target = $region3
    $region8: #{tpu_custom_call.1} parent=1 // loop_exit
      _
    %1149 = vsyncpa [#allocation3], 1
    %s1150 = scalar_lea.sflag [#allocation3], 1
    %1151 = vsyncpa %s1150, 1
    %1152 = vsyncpa [#allocation4], 1
    %s1153 = scalar_lea.sflag [#allocation4], 1
    %1154 = vsyncpa %s1153, 1

</llo_original>
